<compile_context>
chip_gen: v5e
topology: v5e:2x2
jax: 0.10.0
libtpu: 0.0.40
codegen_flags: <defaults>
</compile_context>

<pallas_src>
import functools

import jax
import jax.numpy as jnp
from jax.experimental import pallas as pl
from jax.experimental.pallas import tpu as pltpu

EPS = 1e-5


def _fused_kernel(x_ref, w_ref, gb_ref, o_ref, *, inv_m):
    # x_ref : (tk, Mp)       bf16  K-chunk of X  (Cin on sublanes, M on lanes)
    # w_ref : (1, Cout, tk)  bf16  matching K-chunk of the scale-folded weight
    # gb_ref: (Cout, 2)      f32   packed (gamma, beta)
    # o_ref : (Cout, Mp)     f32   resident accumulator / final output
    k = pl.program_id(0)

    partial = jnp.dot(w_ref[0], x_ref[...],
                      preferred_element_type=jnp.float32)      # MXU, f32 acc

    @pl.when(k == 0)
    def _():
        o_ref[...] = partial

    @pl.when(k > 0)
    def _():
        o_ref[...] += partial

    @pl.when(k == pl.num_programs(0) - 1)
    def _():
        y = o_ref[...]                                          # (Cout, Mp) f32
        s1 = jnp.sum(y, axis=1, keepdims=True)                  # XLU reduce
        s2 = jnp.sum(y * y, axis=1, keepdims=True)
        mean = s1 * inv_m                                       # inv_m = 1/true M
        var = jnp.maximum(s2 * inv_m - mean * mean, 0.0)        # biased, clamped
        a = jax.lax.rsqrt(var + EPS) * gb_ref[:, 0:1]
        c = gb_ref[:, 1:2] - mean * a
        o_ref[...] = y * a + c                                  # single FMA epilogue


@jax.jit
def fused_mul_conv_bn(x_nchw, scale_nc11, conv_w, gamma, beta):
    """x_nchw: (N, Cin, H, W), scale_nc11: (1, Cin, 1, 1),
    conv_w: (Cout, Cin, 1, 1), gamma/beta: (Cout,). Returns (N, Cout, H, W)."""
    N, Cin, H, W = x_nchw.shape
    Cout = conv_w.shape[0]
    M = N * H * W
    Mp = max(128, ((M + 127) // 128) * 128)         # lane-dense output width

    # K-tiling: 2 chunks if the chunk stays sublane-aligned, else single shot.
    nk = 2 if (Cin % 2 == 0 and (Cin // 2) % 8 == 0) else 1
    tk = Cin // nk

    # NCHW -> (Cin, M); for N == 1 this is a pure reshape (no data movement).
    x2d = jnp.transpose(x_nchw, (1, 0, 2, 3)).reshape(Cin, M)
    x2d = jnp.pad(x2d, ((0, 0), (0, Mp - M))).astype(jnp.bfloat16)

    # Fold per-input-channel scale into the 1x1 conv weight; split K into
    # (nk, Cout, tk) so each block's last dim equals the full array dim.
    w2d = (conv_w.reshape(Cout, Cin) *
           scale_nc11.reshape(1, Cin)).astype(jnp.bfloat16)     # (Cout, Cin)
    w3d = jnp.transpose(w2d.reshape(Cout, nk, tk), (1, 0, 2))   # (nk, Cout, tk)

    gb = jnp.stack([gamma, beta], axis=1).astype(jnp.float32)   # (Cout, 2)

    cost = pl.CostEstimate(
        flops=2 * Cout * Cin * Mp,
        transcendentals=Cout,
        bytes_accessed=(Cin * Mp * 2 + Cout * Cin * 2 + Cout * 2 * 4
                        + Cout * Mp * 4),
    )

    out2d = pl.pallas_call(
        functools.partial(_fused_kernel, inv_m=1.0 / M),
        out_shape=jax.ShapeDtypeStruct((Cout, Mp), jnp.float32),
        grid=(nk,),
        in_specs=[
            pl.BlockSpec((tk, Mp), lambda k: (k, 0)),
            pl.BlockSpec((1, Cout, tk), lambda k: (k, 0, 0)),
            pl.BlockSpec((Cout, 2), lambda k: (0, 0)),
        ],
        out_specs=pl.BlockSpec((Cout, Mp), lambda k: (0, 0)),
        compiler_params=pltpu.CompilerParams(
            dimension_semantics=("arbitrary",)),
        cost_estimate=cost,
    )(x2d, w3d, gb)

    # (Cout, Mp) -> drop pad -> (N, Cout, H, W); free for N == 1.
    out2d = out2d[:, :M]
    return jnp.transpose(out2d.reshape(Cout, N, H, W), (1, 0, 2, 3))


if __name__ == "__main__":
    key = jax.random.PRNGKey(0)
    k1, k2, k3, k4, k5 = jax.random.split(key, 5)

    N, Cin, H, W, Cout = 1, 816, 14, 14, 136

    x255 = jax.random.normal(k1, (N, Cin, H, W), dtype=jnp.float32)
    x260 = jax.random.normal(k2, (1, Cin, 1, 1), dtype=jnp.float32)

    # deterministic parameter init (synthetic weights, no checkpoint load)
    conv_w = jax.random.normal(k3, (Cout, Cin, 1, 1), dtype=jnp.float32) * 0.02
    gamma = 1.0 + 0.1 * jax.random.normal(k4, (Cout,), dtype=jnp.float32)
    beta = 0.1 * jax.random.normal(k5, (Cout,), dtype=jnp.float32)

    out = jax.block_until_ready(fused_mul_conv_bn(x255, x260, conv_w, gamma, beta))

    # sanity check against a pure-f32 JAX reference (original layout)
    x_scaled = x255 * x260
    y = jnp.einsum('oc,nchw->nohw', conv_w.reshape(Cout, Cin), x_scaled)
    mu = y.mean(axis=(0, 2, 3), keepdims=True)
    var = ((y - mu) ** 2).mean(axis=(0, 2, 3), keepdims=True)  # biased (train-mode BN)
    ref = ((y - mu) / jnp.sqrt(var + EPS)) * gamma.reshape(1, Cout, 1, 1) \
          + beta.reshape(1, Cout, 1, 1)

    assert out.shape == (N, Cout, H, W)
    # bf16 matmul inputs (f32 accumulation) over K=816 => up to ~1e-2 abs error
    # after BN normalization; tolerance loosened accordingly.
    max_err = jnp.max(jnp.abs(out - ref))
    assert max_err < 3e-2, max_err

    print("KERNEL_OK")
</pallas_src>

<mosaic_0001>
module attributes {stable_mosaic.version = 11 : i64} {
  func.func @_fused_kernel(%arg0: i32, %arg1: memref<408x256xbf16, #tpu.memory_space<vmem>>, %arg2: memref<1x136x408xbf16, #tpu.memory_space<vmem>>, %arg3: memref<136x2xf32, #tpu.memory_space<vmem>>, %arg4: memref<136x256xf32, #tpu.memory_space<vmem>>) attributes {dimension_semantics = [#tpu.dimension_semantics<arbitrary>], iteration_bounds = array<i64: 2>, scalar_prefetch = 0 : i64, scratch_operands = 0 : i64, tpu.core_type = #tpu.core_type<tc>, window_params = [{transform_indices = @transform_0, window_bounds = array<i64: 408, 256>}, {transform_indices = @transform_1, window_bounds = array<i64: 1, 136, 408>}, {pipeline_mode = #tpu.pipeline_mode<synchronous>, transform_indices = @transform_2, window_bounds = array<i64: 136, 2>}, {pipeline_mode = #tpu.pipeline_mode<synchronous>, transform_indices = @transform_3, window_bounds = array<i64: 136, 256>}]} {
    %c0 = arith.constant 0 : index
    %c0_0 = arith.constant 0 : index
    %c0_1 = arith.constant 0 : index
    %0 = vector.load %arg2[%c0, %c0_0, %c0_1] : memref<1x136x408xbf16, #tpu.memory_space<vmem>>, vector<1x136x408xbf16>
    %1 = vector.shape_cast %0 : vector<1x136x408xbf16> to vector<136x408xbf16>
    %c0_2 = arith.constant 0 : index
    %c0_3 = arith.constant 0 : index
    %2 = vector.load %arg1[%c0_2, %c0_3] : memref<408x256xbf16, #tpu.memory_space<vmem>>, vector<408x256xbf16>
    %cst = arith.constant dense<0.000000e+00> : vector<136x256xf32>
    %3 = tpu.matmul %1, %2, %cst {dimension_numbers = #tpu.dot_dimension_numbers<[1], [0], [0], [1], [0, 0, 1, 1], [], []>} : vector<136x408xbf16>, vector<408x256xbf16>, vector<136x256xf32> -> vector<136x256xf32>
    %c0_i32 = arith.constant 0 : i32
    %4 = arith.cmpi eq, %arg0, %c0_i32 : i32
    %5 = arith.extui %4 : i1 to i32
    %c0_i32_4 = arith.constant 0 : i32
    %6 = arith.cmpi ne, %5, %c0_i32_4 : i32
    scf.if %6 {
      %c0_8 = arith.constant 0 : index
      %c0_9 = arith.constant 0 : index
      %13 = vector.load %arg4[%c0_8, %c0_9] : memref<136x256xf32, #tpu.memory_space<vmem>>, vector<136x256xf32>
      tpu.vector_store %arg4[%c0_8, %c0_9], %3 {strides = array<i32>} : memref<136x256xf32, #tpu.memory_space<vmem>>, vector<136x256xf32>,
    } else {
    }
    %c0_i32_5 = arith.constant 0 : i32
    %7 = arith.cmpi sgt, %arg0, %c0_i32_5 : i32
    %8 = arith.extui %7 : i1 to i32
    %c0_i32_6 = arith.constant 0 : i32
    %9 = arith.cmpi ne, %8, %c0_i32_6 : i32
    scf.if %9 {
      %c0_8 = arith.constant 0 : index
      %c0_9 = arith.constant 0 : index
      %13 = vector.load %arg4[%c0_8, %c0_9] : memref<136x256xf32, #tpu.memory_space<vmem>>, vector<136x256xf32>
      %14 = arith.addf %13, %3 : vector<136x256xf32>
      %c0_10 = arith.constant 0 : index
      %c0_11 = arith.constant 0 : index
      %15 = vector.load %arg4[%c0_10, %c0_11] : memref<136x256xf32, #tpu.memory_space<vmem>>, vector<136x256xf32>
      tpu.vector_store %arg4[%c0_10, %c0_11], %14 {strides = array<i32>} : memref<136x256xf32, #tpu.memory_space<vmem>>, vector<136x256xf32>,
    } else {
    }
    %c1_i32 = arith.constant 1 : i32
    %10 = arith.cmpi eq, %arg0, %c1_i32 : i32
    %11 = arith.extui %10 : i1 to i32
    %c0_i32_7 = arith.constant 0 : i32
    %12 = arith.cmpi ne, %11, %c0_i32_7 : i32
    scf.if %12 {
      %c0_8 = arith.constant 0 : index
      %c0_9 = arith.constant 0 : index
      %13 = vector.load %arg4[%c0_8, %c0_9] : memref<136x256xf32, #tpu.memory_space<vmem>>, vector<136x256xf32>
      %cst_10 = arith.constant dense<0.000000e+00> : vector<136xf32>
      %14 = vector.multi_reduction <add>, %13, %cst_10 [1] : vector<136x256xf32> to vector<136xf32>
      %15 = vector.shape_cast %14 : vector<136xf32> to vector<136x1xf32>
      %16 = arith.mulf %13, %13 : vector<136x256xf32>
      %cst_11 = arith.constant dense<0.000000e+00> : vector<136xf32>
      %17 = vector.multi_reduction <add>, %16, %cst_11 [1] : vector<136x256xf32> to vector<136xf32>
      %18 = vector.shape_cast %17 : vector<136xf32> to vector<136x1xf32>
      %cst_12 = arith.constant 0.00510204071 : f32
      %19 = vector.broadcast %cst_12 : f32 to vector<136x1xf32>
      %20 = arith.mulf %15, %19 : vector<136x1xf32>
      %cst_13 = arith.constant 0.00510204071 : f32
      %21 = vector.broadcast %cst_13 : f32 to vector<136x1xf32>
      %22 = arith.mulf %18, %21 : vector<136x1xf32>
      %23 = arith.mulf %20, %20 : vector<136x1xf32>
      %24 = arith.subf %22, %23 : vector<136x1xf32>
      %cst_14 = arith.constant 0.000000e+00 : f32
      %25 = vector.broadcast %cst_14 : f32 to vector<136x1xf32>
      %26 = arith.maximumf %24, %25 : vector<136x1xf32>
      %cst_15 = arith.constant 9.99999974E-6 : f32
      %27 = vector.broadcast %cst_15 : f32 to vector<136x1xf32>
      %28 = arith.addf %26, %27 : vector<136x1xf32>
      %29 = math.rsqrt %28 : vector<136x1xf32>
      %c0_16 = arith.constant 0 : index
      %c0_17 = arith.constant 0 : index
      %30 = vector.load %arg3[%c0_16, %c0_17] : memref<136x2xf32, #tpu.memory_space<vmem>>, vector<136x1xf32>
      %31 = arith.mulf %29, %30 : vector<136x1xf32>
      %c0_18 = arith.constant 0 : index
      %c1 = arith.constant 1 : index
      %32 = vector.load %arg3[%c0_18, %c1] : memref<136x2xf32, #tpu.memory_space<vmem>>, vector<136x1xf32>
      %33 = arith.mulf %20, %31 : vector<136x1xf32>
      %34 = arith.subf %32, %33 : vector<136x1xf32>
      %35 = vector.broadcast %31 : vector<136x1xf32> to vector<136x256xf32>
      %36 = arith.mulf %13, %35 : vector<136x256xf32>
      %37 = vector.broadcast %34 : vector<136x1xf32> to vector<136x256xf32>
      %38 = arith.addf %36, %37 : vector<136x256xf32>
      %c0_19 = arith.constant 0 : index
      %c0_20 = arith.constant 0 : index
      %39 = vector.load %arg4[%c0_19, %c0_20] : memref<136x256xf32, #tpu.memory_space<vmem>>, vector<136x256xf32>
      tpu.vector_store %arg4[%c0_19, %c0_20], %38 {strides = array<i32>} : memref<136x256xf32, #tpu.memory_space<vmem>>, vector<136x256xf32>,
    } else {
    }
    return
  }
  func.func @transform_0(%arg0: i32) -> (i32, i32) {
    %c0_i32 = arith.constant 0 : i32
    %c0_i32_0 = arith.constant 0 : i32
    return %arg0, %c0_i32 : i32, i32
  }
  func.func @transform_1(%arg0: i32) -> (i32, i32, i32) {
    %c0_i32 = arith.constant 0 : i32
    %c0_i32_0 = arith.constant 0 : i32
    %c0_i32_1 = arith.constant 0 : i32
    return %arg0, %c0_i32, %c0_i32_0 : i32, i32, i32
  }
  func.func @transform_2(%arg0: i32) -> (i32, i32) {
    %c0_i32 = arith.constant 0 : i32
    %c0_i32_0 = arith.constant 0 : i32
    %c0_i32_1 = arith.constant 0 : i32
    return %c0_i32, %c0_i32_0 : i32, i32
  }
  func.func @transform_3(%arg0: i32) -> (i32, i32) {
    %c0_i32 = arith.constant 0 : i32
    %c0_i32_0 = arith.constant 0 : i32
    %c0_i32_1 = arith.constant 0 : i32
    return %c0_i32, %c0_i32_0 : i32, i32
  }
}

</mosaic_0001>

<llo_original>
// kernel: fused_mul_conv_bn.1
$region0: #{fused_mul_conv_bn.1}
  #allocation0 [shape = 'u32[]', space=smem, size = 0x4, offset = 0x4, fixed_abs, tag = 'smem constant byte address 0x4 - core index']
  #allocation1 [shape = 'u32[72,128]{1,0:T(1,128)}', space=vmem, size = 0x9000, scoped, tag = 'internal scratch']
  %s0 = inlined_call_operand.vmem [shape: bf16[816,256], index: 0, kind: input, shape index: {}]
  %s1 = inlined_call_operand.vmem [shape: bf16[2,136,408], index: 1, kind: input, shape index: {}]
  %s2 = inlined_call_operand.vmem [shape: f32[136,2], index: 2, kind: input, shape index: {}]
  %s3 = inlined_call_operand.vmem [shape: f32[136,256], index: 3, kind: output, shape index: {}]
  %s4 = sld [smem:[#allocation0]]
  $region57: #{fused_mul_conv_bn.1} parent=0
    _
  %s6 = ssub.s32 1, %s4
  %s7 = scalar_select 0, %s6, %s4
  loop: start=0, step=1, limit=4
  $region2: #{fused_mul_conv_bn.1} parent=0 // loop_pre_header
    _
  $region3: #{fused_mul_conv_bn.1} parent=0 // loop_header
    %s9 = sphi 0, %s13
    %p10 = scmp.ge.s32.totalorder %s9, 4
    %s19 = sphi 0, %s21
    %s22 = sphi 0, %s19
    %s23 = sphi 0, %s22
    %s39 = sphi 0, %s23
    %s45 = sphi 0, %s47
    %s48 = sphi 0, %s45
    %s49 = sphi 0, %s48
    %s65 = sphi 0, %s49
    %s69 = sphi 0, %s69
    %s71 = sphi 0, %s69
    %s72 = sphi 0, %s71
    %s86 = sphi 0, %s72
    %s90 = sphi 0, %s90
    %s92 = sphi 0, %s90
    %s93 = sphi 0, %s92
    %s107 = sphi 0, %s93
  $region4: #{fused_mul_conv_bn.1} parent=0 // loop_header_branch
    %12 = sbr.rel (%p10) target = $region8
  $region5: #{fused_mul_conv_bn.1} parent=0 // loop_body
    %s14 = ssub.s32 %s9, 1
    %s15 = ssub.s32 %s9, 2
    %s16 = sadd.s32 %s9, 1
    %s17 = ssub.s32 %s9, %s16
    %p18 = scmp.eq.s32.totalorder %s17, 0
    %s20 = sadd.s32 %s19, 1
    %s21 = scalar_select %p18, %s19, %s20
    %p24 = pneg %p18
    %p25 = scmp.eq.s32.totalorder %s9, 1
    %p26 = por %p24, %p25
    %p27 = scmp.ne.s32.totalorder %s19, %s22
    %p28 = scmp.eq.s32.totalorder %s9, 0
    %p29 = por %p27, %p28
    %p30 = scmp.ne.s32.totalorder %s19, %s22
    %p31 = scmp.eq.s32.totalorder %s14, 1
    %p32 = por %p30, %p31
    %p33 = scmp.ne.s32.totalorder %s22, %s23
    %p34 = scmp.eq.s32.totalorder %s14, 0
    %p35 = por %p33, %p34
    %p36 = scmp.ne.s32.totalorder %s22, %s23
    %p37 = scmp.eq.s32.totalorder %s15, 1
    %p38 = por %p36, %p37
    %p40 = scmp.ne.s32.totalorder %s23, %s39
    %p41 = scmp.eq.s32.totalorder %s15, 0
    %p42 = por %p40, %p41
    %s43 = ssub.s32 %s9, %s16
    %p44 = scmp.eq.s32.totalorder %s43, 0
    %s46 = sadd.s32 %s45, 1
    %s47 = scalar_select %p44, %s45, %s46
    %p50 = pneg %p44
    %p51 = scmp.eq.s32.totalorder %s9, 1
    %p52 = por %p50, %p51
    %p53 = scmp.ne.s32.totalorder %s45, %s48
    %p54 = scmp.eq.s32.totalorder %s9, 0
    %p55 = por %p53, %p54
    %p56 = scmp.ne.s32.totalorder %s45, %s48
    %p57 = scmp.eq.s32.totalorder %s14, 1
    %p58 = por %p56, %p57
    %p59 = scmp.ne.s32.totalorder %s48, %s49
    %p60 = scmp.eq.s32.totalorder %s14, 0
    %p61 = por %p59, %p60
    %p62 = scmp.ne.s32.totalorder %s48, %s49
    %p63 = scmp.eq.s32.totalorder %s15, 1
    %p64 = por %p62, %p63
    %p66 = scmp.ne.s32.totalorder %s49, %s65
    %p67 = scmp.eq.s32.totalorder %s15, 0
    %p68 = por %p66, %p67
    %s70 = sadd.s32 %s69, 1
    %p73 = scmp.eq.s32.totalorder %s9, 1
    %p74 = scmp.ne.s32.totalorder %s69, %s71
    %p75 = scmp.eq.s32.totalorder %s9, 0
    %p76 = por %p74, %p75
    %p77 = scmp.ne.s32.totalorder %s69, %s71
    %p78 = scmp.eq.s32.totalorder %s14, 1
    %p79 = por %p77, %p78
    %p80 = scmp.ne.s32.totalorder %s71, %s72
    %p81 = scmp.eq.s32.totalorder %s14, 0
    %p82 = por %p80, %p81
    %p83 = scmp.ne.s32.totalorder %s71, %s72
    %p84 = scmp.eq.s32.totalorder %s15, 1
    %p85 = por %p83, %p84
    %p87 = scmp.ne.s32.totalorder %s72, %s86
    %p88 = scmp.eq.s32.totalorder %s15, 0
    %p89 = por %p87, %p88
    %s91 = sadd.s32 %s90, 1
    %p94 = scmp.eq.s32.totalorder %s9, 1
    %p95 = scmp.ne.s32.totalorder %s90, %s92
    %p96 = scmp.eq.s32.totalorder %s9, 0
    %p97 = por %p95, %p96
    %p98 = scmp.ne.s32.totalorder %s90, %s92
    %p99 = scmp.eq.s32.totalorder %s14, 1
    %p100 = por %p98, %p99
    %p101 = scmp.ne.s32.totalorder %s92, %s93
    %p102 = scmp.eq.s32.totalorder %s14, 0
    %p103 = por %p101, %p102
    %p104 = scmp.ne.s32.totalorder %s92, %s93
    %p105 = scmp.eq.s32.totalorder %s15, 1
    %p106 = por %p104, %p105
    %p108 = scmp.ne.s32.totalorder %s93, %s107
    %p109 = scmp.eq.s32.totalorder %s15, 0
    %p110 = por %p108, %p109
    %p111 = scmp.le.s32.totalorder 1, %s9
    %p112 = scmp.lt.s32.totalorder %s9, 3
    %p113 = pnand %p111, %p112
    %p114 = pneg %p113
    // Predicated region
    $region9: #{fused_mul_conv_bn.1} parent=5 // pred_check
      _
    $region10: #{fused_mul_conv_bn.1} parent=5 // pred_check_branch
      %116 = sbr.rel (%p113) target = $region12
    $region11: #{fused_mul_conv_bn.1} parent=5 // pred_region
      %s117 = ssub.s32 %s9, 1
      // Predicated region
      $region13: #{fused_mul_conv_bn.1} parent=11 // pred_check
        %p118 = pneg %p82
      $region14: #{fused_mul_conv_bn.1} parent=11 // pred_check_branch
        %120 = sbr.rel (%p118) target = $region16
      $region15: #{fused_mul_conv_bn.1} parent=11 // pred_region
        _
      $region16: #{fused_mul_conv_bn.1} parent=11 // pred_fallthru
        _
    $region12: #{fused_mul_conv_bn.1} parent=5 // pred_fallthru
      _
    %p121 = scmp.lt.s32.totalorder %s9, 2
    // Predicated region
    $region17: #{fused_mul_conv_bn.1} parent=5 // pred_check
      %p122 = pneg %p121
    $region18: #{fused_mul_conv_bn.1} parent=5 // pred_check_branch
      %124 = sbr.rel (%p122) target = $region20
    $region19: #{fused_mul_conv_bn.1} parent=5 // pred_region
      // Predicated region
      $region21: #{fused_mul_conv_bn.1} parent=19 // pred_check
        %p125 = pneg %p29
      $region22: #{fused_mul_conv_bn.1} parent=19 // pred_check_branch
        %127 = sbr.rel (%p125) target = $region24
      $region23: #{fused_mul_conv_bn.1} parent=19 // pred_region
        %s128 = smul.u32 51, %s9
        %p129 = scmp.lt.s32.totalorder %s128, 101
        %s130 = scalar_select %p129, %s128, 101
        %s131 = smul.addr %s130, 2
        %s132 = smul.addr %s131, 4
        %s133 = scalar_lea.vmem %s0, %s132
        %s134 = smul.u32 51, %s9
      $region24: #{fused_mul_conv_bn.1} parent=19 // pred_fallthru
        _
      // Predicated region
      $region25: #{fused_mul_conv_bn.1} parent=19 // pred_check
        %p135 = pneg %p55
      $region26: #{fused_mul_conv_bn.1} parent=19 // pred_check_branch
        %137 = sbr.rel (%p135) target = $region28
      $region27: #{fused_mul_conv_bn.1} parent=19 // pred_region
        %p138 = scmp.lt.s32.totalorder %s9, 1
        %s139 = scalar_select %p138, %s9, 1
        %s140 = smul.addr %s139, 68
        %s141 = smul.addr %s140, 4
        %s142 = scalar_lea.vmem %s1, %s141
      $region28: #{fused_mul_conv_bn.1} parent=19 // pred_fallthru
        _
    $region20: #{fused_mul_conv_bn.1} parent=5 // pred_fallthru
      _
    %p143 = scmp.le.s32.totalorder 1, %s9
    %p144 = scmp.lt.s32.totalorder %s9, 3
    %p145 = pnand %p143, %p144
    %p146 = pneg %p145
    // Predicated region
    $region29: #{fused_mul_conv_bn.1} parent=5 // pred_check
      _
    $region30: #{fused_mul_conv_bn.1} parent=5 // pred_check_branch
      %148 = sbr.rel (%p145) target = $region32
    $region31: #{fused_mul_conv_bn.1} parent=5 // pred_region
      %s149 = ssub.s32 %s9, 1
      %s150 = smul.u32 51, %s14
      %p151 = scmp.lt.s32.totalorder %s150, 101
      %s152 = scalar_select %p151, %s150, 101
      %s153 = smul.addr %s152, 2
      %s154 = smul.addr %s153, 4
      %s155 = scalar_lea.vmem %s0, %s154
      %p156 = pneg %p35
      %p157 = pneg %p32
      %p158 = scmp.lt.s32.totalorder %s14, 1
      %s159 = scalar_select %p158, %s14, 1
      %s160 = smul.addr %s159, 68
      %s161 = smul.addr %s160, 4
      %s162 = scalar_lea.vmem %s1, %s161
      %p163 = pneg %p61
      %p164 = pneg %p58
      %p165 = pneg %p82
      %p166 = pneg %p79
      %p167 = pneg %p103
      %p168 = pneg %p100
      %s169 = smul.u32 51, %s14
      %p170 = scmp.lt.s32.totalorder %s169, 101
      %s171 = scalar_select %p170, %s169, 101
      %s172 = smul.addr %s171, 2
      %s173 = smul.addr %s172, 4
      %s174 = scalar_lea.vmem %s0, %s173
      %s175 = smul.u32 51, %s14
      %p176 = scmp.lt.s32.totalorder %s14, 1
      %s177 = scalar_select %p176, %s14, 1
      %s178 = smul.addr %s177, 68
      %s179 = smul.addr %s178, 4
      %s180 = scalar_lea.vmem %s1, %s179
      %v182 = vld [vmem:[%s180] sm:$0xff]
      %v183 = vld [vmem:[%s180 + $0x8] sm:$0xff]
      %v184 = vld [vmem:[%s180 + $0x10] sm:$0xff]
      %v185 = vld [vmem:[%s180 + $0x18] sm:$0xff]
      %v186 = vld [vmem:[%s180 + $0x20] sm:$0xff]
      %v187 = vld [vmem:[%s180 + $0x28] sm:$0xff]
      %v188 = vld [vmem:[%s180 + $0x30] sm:$0xff]
      %v189 = vld [vmem:[%s180 + $0x38] sm:$0xff]
      %v190 = vld [vmem:[%s180 + $0x40] sm:$0xff]
      %v191 = vld [vmem:[%s180 + $0x48] sm:$0xff]
      %v192 = vld [vmem:[%s180 + $0x50] sm:$0xff]
      %v193 = vld [vmem:[%s180 + $0x58] sm:$0xff]
      %v194 = vld [vmem:[%s180 + $0x60] sm:$0xff]
      %v195 = vld [vmem:[%s180 + $0x68] sm:$0xff]
      %v196 = vld [vmem:[%s180 + $0x70] sm:$0xff]
      %v197 = vld [vmem:[%s180 + $0x78] sm:$0xff]
      %v198 = vld [vmem:[%s180 + $0x80] sm:$0xff]
      %v199 = vld [vmem:[%s180 + $0x88] sm:$0xff]
      %v200 = vld [vmem:[%s180 + $0x90] sm:$0xff]
      %v201 = vld [vmem:[%s180 + $0x98] sm:$0xff]
      %v202 = vld [vmem:[%s180 + $0xa0] sm:$0xff]
      %v203 = vld [vmem:[%s180 + $0xa8] sm:$0xff]
      %v204 = vld [vmem:[%s180 + $0xb0] sm:$0xff]
      %v205 = vld [vmem:[%s180 + $0xb8] sm:$0xff]
      %v206 = vld [vmem:[%s180 + $0xc0] sm:$0xff]
      %v207 = vld [vmem:[%s180 + $0xc8] sm:$0xff]
      %v208 = vld [vmem:[%s180 + $0xd0] sm:$0xff]
      %v209 = vld [vmem:[%s180 + $0xd8] sm:$0xff]
      %v210 = vld [vmem:[%s180 + $0xe0] sm:$0xff]
      %v211 = vld [vmem:[%s180 + $0xe8] sm:$0xff]
      %v212 = vld [vmem:[%s180 + $0xf0] sm:$0xff]
      %v213 = vld [vmem:[%s180 + $0xf8] sm:$0xff]
      %v214 = vld [vmem:[%s180 + $0x100] sm:$0xff]
      %v215 = vld [vmem:[%s180 + $0x108] sm:$0xff]
      %v216 = vld [vmem:[%s174] sm:$0xff]
      %v217 = vld [vmem:[%s174 + $0x8] sm:$0xff]
      %v218 = vld [vmem:[%s174 + $0x10] sm:$0xff]
      %v219 = vld [vmem:[%s174 + $0x18] sm:$0xff]
      %v220 = vld [vmem:[%s174 + $0x20] sm:$0xff]
      %v221 = vld [vmem:[%s174 + $0x28] sm:$0xff]
      %v222 = vld [vmem:[%s174 + $0x30] sm:$0xff]
      %v223 = vld [vmem:[%s174 + $0x38] sm:$0xff]
      %v224 = vld [vmem:[%s174 + $0x40] sm:$0xff]
      %v225 = vld [vmem:[%s174 + $0x48] sm:$0xff]
      %v226 = vld [vmem:[%s174 + $0x50] sm:$0xff]
      %v227 = vld [vmem:[%s174 + $0x58] sm:$0xff]
      %v228 = vld [vmem:[%s174 + $0x60] sm:$0xff]
      %v229 = vld [vmem:[%s174 + $0x68] sm:$0xff]
      %v230 = vld [vmem:[%s174 + $0x70] sm:$0xff]
      %v231 = vld [vmem:[%s174 + $0x78] sm:$0xff]
      %v232 = vld [vmem:[%s174 + $0x80] sm:$0xff]
      %v233 = vld [vmem:[%s174 + $0x88] sm:$0xff]
      %v234 = vld [vmem:[%s174 + $0x90] sm:$0xff]
      %v235 = vld [vmem:[%s174 + $0x98] sm:$0xff]
      %v236 = vld [vmem:[%s174 + $0xa0] sm:$0xff]
      %v237 = vld [vmem:[%s174 + $0xa8] sm:$0xff]
      %v238 = vld [vmem:[%s174 + $0xb0] sm:$0xff]
      %v239 = vld [vmem:[%s174 + $0xb8] sm:$0xff]
      %v240 = vld [vmem:[%s174 + $0xc0] sm:$0xff]
      %v241 = vld [vmem:[%s174 + $0xc8] sm:$0xff]
      %v242 = vld [vmem:[%s174 + $0xd0] sm:$0xff]
      %v243 = vld [vmem:[%s174 + $0xd8] sm:$0xff]
      %v244 = vld [vmem:[%s174 + $0xe0] sm:$0xff]
      %v245 = vld [vmem:[%s174 + $0xe8] sm:$0xff]
      %v246 = vld [vmem:[%s174 + $0xf0] sm:$0xff]
      %v247 = vld [vmem:[%s174 + $0xf8] sm:$0xff]
      %v248 = vld [vmem:[%s174 + $0x100] sm:$0xff]
      %v249 = vld [vmem:[%s174 + $0x108] sm:$0xff]
      %v250 = vld [vmem:[%s174 + $0x110] sm:$0xff]
      %v251 = vld [vmem:[%s174 + $0x118] sm:$0xff]
      %v252 = vld [vmem:[%s174 + $0x120] sm:$0xff]
      %v253 = vld [vmem:[%s174 + $0x128] sm:$0xff]
      %v254 = vld [vmem:[%s174 + $0x130] sm:$0xff]
      %v255 = vld [vmem:[%s174 + $0x138] sm:$0xff]
      %v256 = vld [vmem:[%s174 + $0x140] sm:$0xff]
      %v257 = vld [vmem:[%s174 + $0x148] sm:$0xff]
      %v258 = vld [vmem:[%s174 + $0x150] sm:$0xff]
      %v259 = vld [vmem:[%s174 + $0x158] sm:$0xff]
      %v260 = vld [vmem:[%s174 + $0x160] sm:$0xff]
      %v261 = vld [vmem:[%s174 + $0x168] sm:$0xff]
      %v262 = vld [vmem:[%s174 + $0x170] sm:$0xff]
      %v263 = vld [vmem:[%s174 + $0x178] sm:$0xff]
      %v264 = vld [vmem:[%s174 + $0x180] sm:$0xff]
      %v265 = vld [vmem:[%s174 + $0x188] sm:$0xff]
      %v266 = vld [vmem:[%s174 + $0x190] sm:$0xff]
      %v301 = vunpack.c.l.b16 %v182
      %v302 = vunpack.c.h.b16 %v182
      %v303 = vunpack.c.l.b16 %v183
      %v304 = vunpack.c.h.b16 %v183
      %v305 = vunpack.c.l.b16 %v184
      %v306 = vunpack.c.h.b16 %v184
      %v307 = vunpack.c.l.b16 %v185
      %v308 = vunpack.c.h.b16 %v185
      %v309 = vunpack.c.l.b16 %v186
      %v310 = vunpack.c.h.b16 %v186
      %v311 = vunpack.c.l.b16 %v187
      %v312 = vunpack.c.h.b16 %v187
      %v313 = vunpack.c.l.b16 %v188
      %v314 = vunpack.c.h.b16 %v188
      %v315 = vunpack.c.l.b16 %v189
      %v316 = vunpack.c.h.b16 %v189
      %v317 = vunpack.c.l.b16 %v190
      %v318 = vunpack.c.h.b16 %v190
      %v319 = vunpack.c.l.b16 %v191
      %v320 = vunpack.c.h.b16 %v191
      %v321 = vunpack.c.l.b16 %v192
      %v322 = vunpack.c.h.b16 %v192
      %v323 = vunpack.c.l.b16 %v193
      %v324 = vunpack.c.h.b16 %v193
      %v325 = vunpack.c.l.b16 %v194
      %v326 = vunpack.c.h.b16 %v194
      %v327 = vunpack.c.l.b16 %v195
      %v328 = vunpack.c.h.b16 %v195
      %v329 = vunpack.c.l.b16 %v196
      %v330 = vunpack.c.h.b16 %v196
      %v331 = vunpack.c.l.b16 %v197
      %v332 = vunpack.c.h.b16 %v197
      %v333 = vunpack.c.l.b16 %v198
      %v334 = vunpack.c.h.b16 %v198
      %v335 = vunpack.c.l.b16 %v199
      %v336 = vunpack.c.h.b16 %v199
      %v337 = vunpack.c.l.b16 %v200
      %v338 = vunpack.c.h.b16 %v200
      %v339 = vunpack.c.l.b16 %v201
      %v340 = vunpack.c.h.b16 %v201
      %v341 = vunpack.c.l.b16 %v202
      %v342 = vunpack.c.h.b16 %v202
      %v343 = vunpack.c.l.b16 %v203
      %v344 = vunpack.c.h.b16 %v203
      %v345 = vunpack.c.l.b16 %v204
      %v346 = vunpack.c.h.b16 %v204
      %v347 = vunpack.c.l.b16 %v205
      %v348 = vunpack.c.h.b16 %v205
      %v349 = vunpack.c.l.b16 %v206
      %v350 = vunpack.c.h.b16 %v206
      %v351 = vunpack.c.l.b16 %v207
      %v352 = vunpack.c.h.b16 %v207
      %v353 = vunpack.c.l.b16 %v208
      %v354 = vunpack.c.h.b16 %v208
      %v355 = vunpack.c.l.b16 %v209
      %v356 = vunpack.c.h.b16 %v209
      %v357 = vunpack.c.l.b16 %v210
      %v358 = vunpack.c.h.b16 %v210
      %v359 = vunpack.c.l.b16 %v211
      %v360 = vunpack.c.h.b16 %v211
      %v361 = vunpack.c.l.b16 %v212
      %v362 = vunpack.c.h.b16 %v212
      %v363 = vunpack.c.l.b16 %v213
      %v364 = vunpack.c.h.b16 %v213
      %v365 = vunpack.c.l.b16 %v214
      %v366 = vunpack.c.h.b16 %v214
      %v367 = vunpack.c.l.b16 %v215
      %v368 = vunpack.c.h.b16 %v215
      %v369 = vpack.c.b16 %v305, %v301
      %v370 = vpack.c.b16 %v306, %v302
      %v371 = vpack.c.b16 %v307, %v303
      %v372 = vpack.c.b16 %v308, %v304
      %v373 = vpack.c.b16 %v313, %v309
      %v374 = vpack.c.b16 %v314, %v310
      %v375 = vpack.c.b16 %v315, %v311
      %v376 = vpack.c.b16 %v316, %v312
      %v377 = vpack.c.b16 %v321, %v317
      %v378 = vpack.c.b16 %v322, %v318
      %v379 = vpack.c.b16 %v323, %v319
      %v380 = vpack.c.b16 %v324, %v320
      %v381 = vpack.c.b16 %v329, %v325
      %v382 = vpack.c.b16 %v330, %v326
      %v383 = vpack.c.b16 %v331, %v327
      %v384 = vpack.c.b16 %v332, %v328
      %v385 = vpack.c.b16 %v337, %v333
      %v386 = vpack.c.b16 %v338, %v334
      %v387 = vpack.c.b16 %v339, %v335
      %v388 = vpack.c.b16 %v340, %v336
      %v389 = vpack.c.b16 %v345, %v341
      %v390 = vpack.c.b16 %v346, %v342
      %v391 = vpack.c.b16 %v347, %v343
      %v392 = vpack.c.b16 %v348, %v344
      %v393 = vpack.c.b16 %v353, %v349
      %v394 = vpack.c.b16 %v354, %v350
      %v395 = vpack.c.b16 %v355, %v351
      %v396 = vpack.c.b16 %v356, %v352
      %v397 = vpack.c.b16 %v361, %v357
      %v398 = vpack.c.b16 %v362, %v358
      %v399 = vpack.c.b16 %v363, %v359
      %v400 = vpack.c.b16 %v364, %v360
      %v401 = vpack.c.b16 %v365, %v365
      %v402 = vpack.c.b16 %v366, %v366
      %v403 = vpack.c.b16 %v367, %v367
      %v404 = vpack.c.b16 %v368, %v368
      %v483 = vunpack.c.l.b16 %v216
      %v484 = vunpack.c.h.b16 %v216
      %v485 = vunpack.c.l.b16 %v217
      %v486 = vunpack.c.h.b16 %v217
      %v487 = vunpack.c.l.b16 %v218
      %v488 = vunpack.c.h.b16 %v218
      %v489 = vunpack.c.l.b16 %v219
      %v490 = vunpack.c.h.b16 %v219
      %v491 = vunpack.c.l.b16 %v220
      %v492 = vunpack.c.h.b16 %v220
      %v493 = vunpack.c.l.b16 %v221
      %v494 = vunpack.c.h.b16 %v221
      %v495 = vunpack.c.l.b16 %v222
      %v496 = vunpack.c.h.b16 %v222
      %v497 = vunpack.c.l.b16 %v223
      %v498 = vunpack.c.h.b16 %v223
      %v499 = vunpack.c.l.b16 %v224
      %v500 = vunpack.c.h.b16 %v224
      %v501 = vunpack.c.l.b16 %v225
      %v502 = vunpack.c.h.b16 %v225
      %v503 = vunpack.c.l.b16 %v226
      %v504 = vunpack.c.h.b16 %v226
      %v505 = vunpack.c.l.b16 %v227
      %v506 = vunpack.c.h.b16 %v227
      %v507 = vunpack.c.l.b16 %v228
      %v508 = vunpack.c.h.b16 %v228
      %v509 = vunpack.c.l.b16 %v229
      %v510 = vunpack.c.h.b16 %v229
      %v511 = vunpack.c.l.b16 %v230
      %v512 = vunpack.c.h.b16 %v230
      %v513 = vunpack.c.l.b16 %v231
      %v514 = vunpack.c.h.b16 %v231
      %v515 = vunpack.c.l.b16 %v232
      %v516 = vunpack.c.h.b16 %v232
      %v517 = vunpack.c.l.b16 %v233
      %v518 = vunpack.c.h.b16 %v233
      %v519 = vunpack.c.l.b16 %v234
      %v520 = vunpack.c.h.b16 %v234
      %v521 = vunpack.c.l.b16 %v235
      %v522 = vunpack.c.h.b16 %v235
      %v523 = vunpack.c.l.b16 %v236
      %v524 = vunpack.c.h.b16 %v236
      %v525 = vunpack.c.l.b16 %v237
      %v526 = vunpack.c.h.b16 %v237
      %v527 = vunpack.c.l.b16 %v238
      %v528 = vunpack.c.h.b16 %v238
      %v529 = vunpack.c.l.b16 %v239
      %v530 = vunpack.c.h.b16 %v239
      %v531 = vunpack.c.l.b16 %v240
      %v532 = vunpack.c.h.b16 %v240
      %v533 = vunpack.c.l.b16 %v241
      %v534 = vunpack.c.h.b16 %v241
      %v535 = vunpack.c.l.b16 %v242
      %v536 = vunpack.c.h.b16 %v242
      %v537 = vunpack.c.l.b16 %v243
      %v538 = vunpack.c.h.b16 %v243
      %v539 = vunpack.c.l.b16 %v244
      %v540 = vunpack.c.h.b16 %v244
      %v541 = vunpack.c.l.b16 %v245
      %v542 = vunpack.c.h.b16 %v245
      %v543 = vunpack.c.l.b16 %v246
      %v544 = vunpack.c.h.b16 %v246
      %v545 = vunpack.c.l.b16 %v247
      %v546 = vunpack.c.h.b16 %v247
      %v547 = vunpack.c.l.b16 %v248
      %v548 = vunpack.c.h.b16 %v248
      %v549 = vunpack.c.l.b16 %v249
      %v550 = vunpack.c.h.b16 %v249
      %v551 = vunpack.c.l.b16 %v250
      %v552 = vunpack.c.h.b16 %v250
      %v553 = vunpack.c.l.b16 %v251
      %v554 = vunpack.c.h.b16 %v251
      %v555 = vunpack.c.l.b16 %v252
      %v556 = vunpack.c.h.b16 %v252
      %v557 = vunpack.c.l.b16 %v253
      %v558 = vunpack.c.h.b16 %v253
      %v559 = vunpack.c.l.b16 %v254
      %v560 = vunpack.c.h.b16 %v254
      %v561 = vunpack.c.l.b16 %v255
      %v562 = vunpack.c.h.b16 %v255
      %v563 = vunpack.c.l.b16 %v256
      %v564 = vunpack.c.h.b16 %v256
      %v565 = vunpack.c.l.b16 %v257
      %v566 = vunpack.c.h.b16 %v257
      %v567 = vunpack.c.l.b16 %v258
      %v568 = vunpack.c.h.b16 %v258
      %v569 = vunpack.c.l.b16 %v259
      %v570 = vunpack.c.h.b16 %v259
      %v571 = vunpack.c.l.b16 %v260
      %v572 = vunpack.c.h.b16 %v260
      %v573 = vunpack.c.l.b16 %v261
      %v574 = vunpack.c.h.b16 %v261
      %v575 = vunpack.c.l.b16 %v262
      %v576 = vunpack.c.h.b16 %v262
      %v577 = vunpack.c.l.b16 %v263
      %v578 = vunpack.c.h.b16 %v263
      %v579 = vunpack.c.l.b16 %v264
      %v580 = vunpack.c.h.b16 %v264
      %v581 = vunpack.c.l.b16 %v265
      %v582 = vunpack.c.h.b16 %v265
      %v583 = vunpack.c.l.b16 %v266
      %v584 = vunpack.c.h.b16 %v266
      %v585 = vpack.c.b16 %v485, %v483
      %v586 = vpack.c.b16 %v486, %v484
      %v587 = vpack.c.b16 %v489, %v487
      %v588 = vpack.c.b16 %v490, %v488
      %v589 = vpack.c.b16 %v493, %v491
      %v590 = vpack.c.b16 %v494, %v492
      %v591 = vpack.c.b16 %v497, %v495
      %v592 = vpack.c.b16 %v498, %v496
      %v593 = vpack.c.b16 %v501, %v499
      %v594 = vpack.c.b16 %v502, %v500
      %v595 = vpack.c.b16 %v505, %v503
      %v596 = vpack.c.b16 %v506, %v504
      %v597 = vpack.c.b16 %v509, %v507
      %v598 = vpack.c.b16 %v510, %v508
      %v599 = vpack.c.b16 %v513, %v511
      %v600 = vpack.c.b16 %v514, %v512
      %v601 = vpack.c.b16 %v517, %v515
      %v602 = vpack.c.b16 %v518, %v516
      %v603 = vpack.c.b16 %v521, %v519
      %v604 = vpack.c.b16 %v522, %v520
      %v605 = vpack.c.b16 %v525, %v523
      %v606 = vpack.c.b16 %v526, %v524
      %v607 = vpack.c.b16 %v529, %v527
      %v608 = vpack.c.b16 %v530, %v528
      %v609 = vpack.c.b16 %v533, %v531
      %v610 = vpack.c.b16 %v534, %v532
      %v611 = vpack.c.b16 %v537, %v535
      %v612 = vpack.c.b16 %v538, %v536
      %v613 = vpack.c.b16 %v541, %v539
      %v614 = vpack.c.b16 %v542, %v540
      %v615 = vpack.c.b16 %v545, %v543
      %v616 = vpack.c.b16 %v546, %v544
      %v617 = vpack.c.b16 %v549, %v547
      %v618 = vpack.c.b16 %v550, %v548
      %v619 = vpack.c.b16 %v553, %v551
      %v620 = vpack.c.b16 %v554, %v552
      %v621 = vpack.c.b16 %v557, %v555
      %v622 = vpack.c.b16 %v558, %v556
      %v623 = vpack.c.b16 %v561, %v559
      %v624 = vpack.c.b16 %v562, %v560
      %v625 = vpack.c.b16 %v565, %v563
      %v626 = vpack.c.b16 %v566, %v564
      %v627 = vpack.c.b16 %v569, %v567
      %v628 = vpack.c.b16 %v570, %v568
      %v629 = vpack.c.b16 %v573, %v571
      %v630 = vpack.c.b16 %v574, %v572
      %v631 = vpack.c.b16 %v577, %v575
      %v632 = vpack.c.b16 %v578, %v576
      %v633 = vpack.c.b16 %v581, %v579
      %v634 = vpack.c.b16 %v582, %v580
      %v635 = vpack.c.b16 %v583, %v583
      %v636 = vpack.c.b16 %v584, %v584
      %vm687 = vcmask 195584
      %v689 = vsel %vm687, %v372, 0
      %v692 = vsel %vm687, %v376, 0
      %v695 = vsel %vm687, %v380, 0
      %v698 = vsel %vm687, %v384, 0
      %v701 = vsel %vm687, %v388, 0
      %v704 = vsel %vm687, %v392, 0
      %v707 = vsel %vm687, %v396, 0
      %v710 = vsel %vm687, %v400, 0
      %v713 = vsel %vm687, %v404, 0
      %vm715 = vcmask 1043456
      %v717 = vsel %vm715, %v635, 0
      %v720 = vsel %vm715, %v636, 0
      %722 = vmatpush.bf16.msra.mxu0 %v599
      %723 = vmatpush.bf16.msra.mxu0 %v597
      %724 = vmatpush.bf16.msra.mxu0 %v595
      %725 = vmatpush.bf16.msra.mxu0 %v593
      %726 = vmatpush.bf16.msra.mxu0 %v591
      %727 = vmatpush.bf16.msra.mxu0 %v589
      %728 = vmatpush.bf16.msra.mxu0 %v587
      %729 = vmatpush.bf16.msra.mxu0 %v585
      %730 = vmatmul.bf16.gmra.mxu0 %v369
      %v731 = vpop.f32.mrf.mxu0
      %v732 = vadd.f32 0.0, %v731
      %v733 = vpop.f32.mrf.mxu0
      %v734 = vadd.f32 0.0, %v733
      %735 = vmatmul.bf16.gmra.mxu0 %v373
      %v736 = vpop.f32.mrf.mxu0
      %v737 = vadd.f32 0.0, %v736
      %v738 = vpop.f32.mrf.mxu0
      %v739 = vadd.f32 0.0, %v738
      %740 = vmatmul.bf16.gmra.mxu0 %v377
      %v741 = vpop.f32.mrf.mxu0
      %v742 = vadd.f32 0.0, %v741
      %v743 = vpop.f32.mrf.mxu0
      %v744 = vadd.f32 0.0, %v743
      %745 = vmatmul.bf16.gmra.mxu0 %v381
      %v746 = vpop.f32.mrf.mxu0
      %v747 = vadd.f32 0.0, %v746
      %v748 = vpop.f32.mrf.mxu0
      %v749 = vadd.f32 0.0, %v748
      %750 = vmatmul.bf16.gmra.mxu0 %v385
      %v751 = vpop.f32.mrf.mxu0
      %v752 = vadd.f32 0.0, %v751
      %v753 = vpop.f32.mrf.mxu0
      %v754 = vadd.f32 0.0, %v753
      %755 = vmatmul.bf16.gmra.mxu0 %v389
      %v756 = vpop.f32.mrf.mxu0
      %v757 = vadd.f32 0.0, %v756
      %v758 = vpop.f32.mrf.mxu0
      %v759 = vadd.f32 0.0, %v758
      %760 = vmatmul.bf16.gmra.mxu0 %v393
      %v761 = vpop.f32.mrf.mxu0
      %v762 = vadd.f32 0.0, %v761
      %v763 = vpop.f32.mrf.mxu0
      %v764 = vadd.f32 0.0, %v763
      %765 = vmatmul.bf16.gmra.mxu0 %v397
      %v766 = vpop.f32.mrf.mxu0
      %v767 = vadd.f32 0.0, %v766
      %v768 = vpop.f32.mrf.mxu0
      %v769 = vadd.f32 0.0, %v768
      %770 = vmatmul.bf16.gmra.mxu0 %v401
      %v771 = vpop.f32.mrf.mxu0
      %v772 = vadd.f32 0.0, %v771
      %v773 = vpop.f32.mrf.mxu0
      %774 = vdwg.mxu0
      %775 = vmatpush.bf16.msra.mxu0 %v615
      %776 = vmatpush.bf16.msra.mxu0 %v613
      %777 = vmatpush.bf16.msra.mxu0 %v611
      %778 = vmatpush.bf16.msra.mxu0 %v609
      %779 = vmatpush.bf16.msra.mxu0 %v607
      %780 = vmatpush.bf16.msra.mxu0 %v605
      %781 = vmatpush.bf16.msra.mxu0 %v603
      %782 = vmatpush.bf16.msra.mxu0 %v601
      %783 = vmatmul.bf16.gmra.mxu0 %v370
      %v784 = vpop.f32.mrf.mxu0
      %v785 = vadd.f32 %v732, %v784
      %v786 = vpop.f32.mrf.mxu0
      %v787 = vadd.f32 %v734, %v786
      %788 = vmatmul.bf16.gmra.mxu0 %v374
      %v789 = vpop.f32.mrf.mxu0
      %v790 = vadd.f32 %v737, %v789
      %v791 = vpop.f32.mrf.mxu0
      %v792 = vadd.f32 %v739, %v791
      %793 = vmatmul.bf16.gmra.mxu0 %v378
      %v794 = vpop.f32.mrf.mxu0
      %v795 = vadd.f32 %v742, %v794
      %v796 = vpop.f32.mrf.mxu0
      %v797 = vadd.f32 %v744, %v796
      %798 = vmatmul.bf16.gmra.mxu0 %v382
      %v799 = vpop.f32.mrf.mxu0
      %v800 = vadd.f32 %v747, %v799
      %v801 = vpop.f32.mrf.mxu0
      %v802 = vadd.f32 %v749, %v801
      %803 = vmatmul.bf16.gmra.mxu0 %v386
      %v804 = vpop.f32.mrf.mxu0
      %v805 = vadd.f32 %v752, %v804
      %v806 = vpop.f32.mrf.mxu0
      %v807 = vadd.f32 %v754, %v806
      %808 = vmatmul.bf16.gmra.mxu0 %v390
      %v809 = vpop.f32.mrf.mxu0
      %v810 = vadd.f32 %v757, %v809
      %v811 = vpop.f32.mrf.mxu0
      %v812 = vadd.f32 %v759, %v811
      %813 = vmatmul.bf16.gmra.mxu0 %v394
      %v814 = vpop.f32.mrf.mxu0
      %v815 = vadd.f32 %v762, %v814
      %v816 = vpop.f32.mrf.mxu0
      %v817 = vadd.f32 %v764, %v816
      %818 = vmatmul.bf16.gmra.mxu0 %v398
      %v819 = vpop.f32.mrf.mxu0
      %v820 = vadd.f32 %v767, %v819
      %v821 = vpop.f32.mrf.mxu0
      %v822 = vadd.f32 %v769, %v821
      %823 = vmatmul.bf16.gmra.mxu0 %v402
      %v824 = vpop.f32.mrf.mxu0
      %v825 = vadd.f32 %v772, %v824
      %v826 = vpop.f32.mrf.mxu0
      %827 = vdwg.mxu0
      %828 = vmatpush.bf16.msra.mxu0 %v631
      %829 = vmatpush.bf16.msra.mxu0 %v629
      %830 = vmatpush.bf16.msra.mxu0 %v627
      %831 = vmatpush.bf16.msra.mxu0 %v625
      %832 = vmatpush.bf16.msra.mxu0 %v623
      %833 = vmatpush.bf16.msra.mxu0 %v621
      %834 = vmatpush.bf16.msra.mxu0 %v619
      %835 = vmatpush.bf16.msra.mxu0 %v617
      %836 = vmatmul.bf16.gmra.mxu0 %v371
      %v837 = vpop.f32.mrf.mxu0
      %v838 = vadd.f32 %v785, %v837
      %v839 = vpop.f32.mrf.mxu0
      %v840 = vadd.f32 %v787, %v839
      %841 = vmatmul.bf16.gmra.mxu0 %v375
      %v842 = vpop.f32.mrf.mxu0
      %v843 = vadd.f32 %v790, %v842
      %v844 = vpop.f32.mrf.mxu0
      %v845 = vadd.f32 %v792, %v844
      %846 = vmatmul.bf16.gmra.mxu0 %v379
      %v847 = vpop.f32.mrf.mxu0
      %v848 = vadd.f32 %v795, %v847
      %v849 = vpop.f32.mrf.mxu0
      %v850 = vadd.f32 %v797, %v849
      %851 = vmatmul.bf16.gmra.mxu0 %v383
      %v852 = vpop.f32.mrf.mxu0
      %v853 = vadd.f32 %v800, %v852
      %v854 = vpop.f32.mrf.mxu0
      %v855 = vadd.f32 %v802, %v854
      %856 = vmatmul.bf16.gmra.mxu0 %v387
      %v857 = vpop.f32.mrf.mxu0
      %v858 = vadd.f32 %v805, %v857
      %v859 = vpop.f32.mrf.mxu0
      %v860 = vadd.f32 %v807, %v859
      %861 = vmatmul.bf16.gmra.mxu0 %v391
      %v862 = vpop.f32.mrf.mxu0
      %v863 = vadd.f32 %v810, %v862
      %v864 = vpop.f32.mrf.mxu0
      %v865 = vadd.f32 %v812, %v864
      %866 = vmatmul.bf16.gmra.mxu0 %v395
      %v867 = vpop.f32.mrf.mxu0
      %v868 = vadd.f32 %v815, %v867
      %v869 = vpop.f32.mrf.mxu0
      %v870 = vadd.f32 %v817, %v869
      %871 = vmatmul.bf16.gmra.mxu0 %v399
      %v872 = vpop.f32.mrf.mxu0
      %v873 = vadd.f32 %v820, %v872
      %v874 = vpop.f32.mrf.mxu0
      %v875 = vadd.f32 %v822, %v874
      %876 = vmatmul.bf16.gmra.mxu0 %v403
      %v877 = vpop.f32.mrf.mxu0
      %v878 = vadd.f32 %v825, %v877
      %v879 = vpop.f32.mrf.mxu0
      %880 = vdwg.mxu0
      %881 = vmatpush.bf16.msra.mxu0 0
      %882 = vmatpush.bf16.msra.mxu0 0
      %883 = vmatpush.bf16.msra.mxu0 0
      %884 = vmatpush.bf16.msra.mxu0 0
      %885 = vmatpush.bf16.msra.mxu0 0
      %886 = vmatpush.bf16.msra.mxu0 0
      %887 = vmatpush.bf16.msra.mxu0 %v717
      %888 = vmatpush.bf16.msra.mxu0 %v633
      %889 = vmatmul.bf16.gmra.mxu0 %v689
      %v890 = vpop.f32.mrf.mxu0
      %v891 = vadd.f32 %v838, %v890
      %v892 = vpop.f32.mrf.mxu0
      %v893 = vadd.f32 %v840, %v892
      %894 = vmatmul.bf16.gmra.mxu0 %v692
      %v895 = vpop.f32.mrf.mxu0
      %v896 = vadd.f32 %v843, %v895
      %v897 = vpop.f32.mrf.mxu0
      %v898 = vadd.f32 %v845, %v897
      %899 = vmatmul.bf16.gmra.mxu0 %v695
      %v900 = vpop.f32.mrf.mxu0
      %v901 = vadd.f32 %v848, %v900
      %v902 = vpop.f32.mrf.mxu0
      %v903 = vadd.f32 %v850, %v902
      %904 = vmatmul.bf16.gmra.mxu0 %v698
      %v905 = vpop.f32.mrf.mxu0
      %v906 = vadd.f32 %v853, %v905
      %v907 = vpop.f32.mrf.mxu0
      %v908 = vadd.f32 %v855, %v907
      %909 = vmatmul.bf16.gmra.mxu0 %v701
      %v910 = vpop.f32.mrf.mxu0
      %v911 = vadd.f32 %v858, %v910
      %v912 = vpop.f32.mrf.mxu0
      %v913 = vadd.f32 %v860, %v912
      %914 = vmatmul.bf16.gmra.mxu0 %v704
      %v915 = vpop.f32.mrf.mxu0
      %v916 = vadd.f32 %v863, %v915
      %v917 = vpop.f32.mrf.mxu0
      %v918 = vadd.f32 %v865, %v917
      %919 = vmatmul.bf16.gmra.mxu0 %v707
      %v920 = vpop.f32.mrf.mxu0
      %v921 = vadd.f32 %v868, %v920
      %v922 = vpop.f32.mrf.mxu0
      %v923 = vadd.f32 %v870, %v922
      %924 = vmatmul.bf16.gmra.mxu0 %v710
      %v925 = vpop.f32.mrf.mxu0
      %v926 = vadd.f32 %v873, %v925
      %v927 = vpop.f32.mrf.mxu0
      %v928 = vadd.f32 %v875, %v927
      %929 = vmatmul.bf16.gmra.mxu0 %v713
      %v930 = vpop.f32.mrf.mxu0
      %v931 = vadd.f32 %v878, %v930
      %v932 = vpop.f32.mrf.mxu0
      %933 = vdwg.mxu0
      %934 = vmatpush.bf16.msra.mxu0 %v600
      %935 = vmatpush.bf16.msra.mxu0 %v598
      %936 = vmatpush.bf16.msra.mxu0 %v596
      %937 = vmatpush.bf16.msra.mxu0 %v594
      %938 = vmatpush.bf16.msra.mxu0 %v592
      %939 = vmatpush.bf16.msra.mxu0 %v590
      %940 = vmatpush.bf16.msra.mxu0 %v588
      %941 = vmatpush.bf16.msra.mxu0 %v586
      %942 = vmatmul.bf16.gmra.mxu0 %v369
      %v943 = vpop.f32.mrf.mxu0
      %v944 = vadd.f32 0.0, %v943
      %v945 = vpop.f32.mrf.mxu0
      %v946 = vadd.f32 0.0, %v945
      %947 = vmatmul.bf16.gmra.mxu0 %v373
      %v948 = vpop.f32.mrf.mxu0
      %v949 = vadd.f32 0.0, %v948
      %v950 = vpop.f32.mrf.mxu0
      %v951 = vadd.f32 0.0, %v950
      %952 = vmatmul.bf16.gmra.mxu0 %v377
      %v953 = vpop.f32.mrf.mxu0
      %v954 = vadd.f32 0.0, %v953
      %v955 = vpop.f32.mrf.mxu0
      %v956 = vadd.f32 0.0, %v955
      %957 = vmatmul.bf16.gmra.mxu0 %v381
      %v958 = vpop.f32.mrf.mxu0
      %v959 = vadd.f32 0.0, %v958
      %v960 = vpop.f32.mrf.mxu0
      %v961 = vadd.f32 0.0, %v960
      %962 = vmatmul.bf16.gmra.mxu0 %v385
      %v963 = vpop.f32.mrf.mxu0
      %v964 = vadd.f32 0.0, %v963
      %v965 = vpop.f32.mrf.mxu0
      %v966 = vadd.f32 0.0, %v965
      %967 = vmatmul.bf16.gmra.mxu0 %v389
      %v968 = vpop.f32.mrf.mxu0
      %v969 = vadd.f32 0.0, %v968
      %v970 = vpop.f32.mrf.mxu0
      %v971 = vadd.f32 0.0, %v970
      %972 = vmatmul.bf16.gmra.mxu0 %v393
      %v973 = vpop.f32.mrf.mxu0
      %v974 = vadd.f32 0.0, %v973
      %v975 = vpop.f32.mrf.mxu0
      %v976 = vadd.f32 0.0, %v975
      %977 = vmatmul.bf16.gmra.mxu0 %v397
      %v978 = vpop.f32.mrf.mxu0
      %v979 = vadd.f32 0.0, %v978
      %v980 = vpop.f32.mrf.mxu0
      %v981 = vadd.f32 0.0, %v980
      %982 = vmatmul.bf16.gmra.mxu0 %v401
      %v983 = vpop.f32.mrf.mxu0
      %v984 = vadd.f32 0.0, %v983
      %v985 = vpop.f32.mrf.mxu0
      %986 = vdwg.mxu0
      %987 = vmatpush.bf16.msra.mxu0 %v616
      %988 = vmatpush.bf16.msra.mxu0 %v614
      %989 = vmatpush.bf16.msra.mxu0 %v612
      %990 = vmatpush.bf16.msra.mxu0 %v610
      %991 = vmatpush.bf16.msra.mxu0 %v608
      %992 = vmatpush.bf16.msra.mxu0 %v606
      %993 = vmatpush.bf16.msra.mxu0 %v604
      %994 = vmatpush.bf16.msra.mxu0 %v602
      %995 = vmatmul.bf16.gmra.mxu0 %v370
      %v996 = vpop.f32.mrf.mxu0
      %v997 = vadd.f32 %v944, %v996
      %v998 = vpop.f32.mrf.mxu0
      %v999 = vadd.f32 %v946, %v998
      %1000 = vmatmul.bf16.gmra.mxu0 %v374
      %v1001 = vpop.f32.mrf.mxu0
      %v1002 = vadd.f32 %v949, %v1001
      %v1003 = vpop.f32.mrf.mxu0
      %v1004 = vadd.f32 %v951, %v1003
      %1005 = vmatmul.bf16.gmra.mxu0 %v378
      %v1006 = vpop.f32.mrf.mxu0
      %v1007 = vadd.f32 %v954, %v1006
      %v1008 = vpop.f32.mrf.mxu0
      %v1009 = vadd.f32 %v956, %v1008
      %1010 = vmatmul.bf16.gmra.mxu0 %v382
      %v1011 = vpop.f32.mrf.mxu0
      %v1012 = vadd.f32 %v959, %v1011
      %v1013 = vpop.f32.mrf.mxu0
      %v1014 = vadd.f32 %v961, %v1013
      %1015 = vmatmul.bf16.gmra.mxu0 %v386
      %v1016 = vpop.f32.mrf.mxu0
      %v1017 = vadd.f32 %v964, %v1016
      %v1018 = vpop.f32.mrf.mxu0
      %v1019 = vadd.f32 %v966, %v1018
      %1020 = vmatmul.bf16.gmra.mxu0 %v390
      %v1021 = vpop.f32.mrf.mxu0
      %v1022 = vadd.f32 %v969, %v1021
      %v1023 = vpop.f32.mrf.mxu0
      %v1024 = vadd.f32 %v971, %v1023
      %1025 = vmatmul.bf16.gmra.mxu0 %v394
      %v1026 = vpop.f32.mrf.mxu0
      %v1027 = vadd.f32 %v974, %v1026
      %v1028 = vpop.f32.mrf.mxu0
      %v1029 = vadd.f32 %v976, %v1028
      %1030 = vmatmul.bf16.gmra.mxu0 %v398
      %v1031 = vpop.f32.mrf.mxu0
      %v1032 = vadd.f32 %v979, %v1031
      %v1033 = vpop.f32.mrf.mxu0
      %v1034 = vadd.f32 %v981, %v1033
      %1035 = vmatmul.bf16.gmra.mxu0 %v402
      %v1036 = vpop.f32.mrf.mxu0
      %v1037 = vadd.f32 %v984, %v1036
      %v1038 = vpop.f32.mrf.mxu0
      %1039 = vdwg.mxu0
      %1040 = vmatpush.bf16.msra.mxu0 %v632
      %1041 = vmatpush.bf16.msra.mxu0 %v630
      %1042 = vmatpush.bf16.msra.mxu0 %v628
      %1043 = vmatpush.bf16.msra.mxu0 %v626
      %1044 = vmatpush.bf16.msra.mxu0 %v624
      %1045 = vmatpush.bf16.msra.mxu0 %v622
      %1046 = vmatpush.bf16.msra.mxu0 %v620
      %1047 = vmatpush.bf16.msra.mxu0 %v618
      %1048 = vmatmul.bf16.gmra.mxu0 %v371
      %v1049 = vpop.f32.mrf.mxu0
      %v1050 = vadd.f32 %v997, %v1049
      %v1051 = vpop.f32.mrf.mxu0
      %v1052 = vadd.f32 %v999, %v1051
      %1053 = vmatmul.bf16.gmra.mxu0 %v375
      %v1054 = vpop.f32.mrf.mxu0
      %v1055 = vadd.f32 %v1002, %v1054
      %v1056 = vpop.f32.mrf.mxu0
      %v1057 = vadd.f32 %v1004, %v1056
      %1058 = vmatmul.bf16.gmra.mxu0 %v379
      %v1059 = vpop.f32.mrf.mxu0
      %v1060 = vadd.f32 %v1007, %v1059
      %v1061 = vpop.f32.mrf.mxu0
      %v1062 = vadd.f32 %v1009, %v1061
      %1063 = vmatmul.bf16.gmra.mxu0 %v383
      %v1064 = vpop.f32.mrf.mxu0
      %v1065 = vadd.f32 %v1012, %v1064
      %v1066 = vpop.f32.mrf.mxu0
      %v1067 = vadd.f32 %v1014, %v1066
      %1068 = vmatmul.bf16.gmra.mxu0 %v387
      %v1069 = vpop.f32.mrf.mxu0
      %v1070 = vadd.f32 %v1017, %v1069
      %v1071 = vpop.f32.mrf.mxu0
      %v1072 = vadd.f32 %v1019, %v1071
      %1073 = vmatmul.bf16.gmra.mxu0 %v391
      %v1074 = vpop.f32.mrf.mxu0
      %v1075 = vadd.f32 %v1022, %v1074
      %v1076 = vpop.f32.mrf.mxu0
      %v1077 = vadd.f32 %v1024, %v1076
      %1078 = vmatmul.bf16.gmra.mxu0 %v395
      %v1079 = vpop.f32.mrf.mxu0
      %v1080 = vadd.f32 %v1027, %v1079
      %v1081 = vpop.f32.mrf.mxu0
      %v1082 = vadd.f32 %v1029, %v1081
      %1083 = vmatmul.bf16.gmra.mxu0 %v399
      %v1084 = vpop.f32.mrf.mxu0
      %v1085 = vadd.f32 %v1032, %v1084
      %v1086 = vpop.f32.mrf.mxu0
      %v1087 = vadd.f32 %v1034, %v1086
      %1088 = vmatmul.bf16.gmra.mxu0 %v403
      %v1089 = vpop.f32.mrf.mxu0
      %v1090 = vadd.f32 %v1037, %v1089
      %v1091 = vpop.f32.mrf.mxu0
      %1092 = vdwg.mxu0
      %1093 = vmatpush.bf16.msra.mxu0 0
      %1094 = vmatpush.bf16.msra.mxu0 0
      %1095 = vmatpush.bf16.msra.mxu0 0
      %1096 = vmatpush.bf16.msra.mxu0 0
      %1097 = vmatpush.bf16.msra.mxu0 0
      %1098 = vmatpush.bf16.msra.mxu0 0
      %1099 = vmatpush.bf16.msra.mxu0 %v720
      %1100 = vmatpush.bf16.msra.mxu0 %v634
      %1101 = vmatmul.bf16.gmra.mxu0 %v689
      %v1102 = vpop.f32.mrf.mxu0
      %v1103 = vadd.f32 %v1050, %v1102
      %v1104 = vpop.f32.mrf.mxu0
      %v1105 = vadd.f32 %v1052, %v1104
      %1106 = vmatmul.bf16.gmra.mxu0 %v692
      %v1107 = vpop.f32.mrf.mxu0
      %v1108 = vadd.f32 %v1055, %v1107
      %v1109 = vpop.f32.mrf.mxu0
      %v1110 = vadd.f32 %v1057, %v1109
      %1111 = vmatmul.bf16.gmra.mxu0 %v695
      %v1112 = vpop.f32.mrf.mxu0
      %v1113 = vadd.f32 %v1060, %v1112
      %v1114 = vpop.f32.mrf.mxu0
      %v1115 = vadd.f32 %v1062, %v1114
      %1116 = vmatmul.bf16.gmra.mxu0 %v698
      %v1117 = vpop.f32.mrf.mxu0
      %v1118 = vadd.f32 %v1065, %v1117
      %v1119 = vpop.f32.mrf.mxu0
      %v1120 = vadd.f32 %v1067, %v1119
      %1121 = vmatmul.bf16.gmra.mxu0 %v701
      %v1122 = vpop.f32.mrf.mxu0
      %v1123 = vadd.f32 %v1070, %v1122
      %v1124 = vpop.f32.mrf.mxu0
      %v1125 = vadd.f32 %v1072, %v1124
      %1126 = vmatmul.bf16.gmra.mxu0 %v704
      %v1127 = vpop.f32.mrf.mxu0
      %v1128 = vadd.f32 %v1075, %v1127
      %v1129 = vpop.f32.mrf.mxu0
      %v1130 = vadd.f32 %v1077, %v1129
      %1131 = vmatmul.bf16.gmra.mxu0 %v707
      %v1132 = vpop.f32.mrf.mxu0
      %v1133 = vadd.f32 %v1080, %v1132
      %v1134 = vpop.f32.mrf.mxu0
      %v1135 = vadd.f32 %v1082, %v1134
      %1136 = vmatmul.bf16.gmra.mxu0 %v710
      %v1137 = vpop.f32.mrf.mxu0
      %v1138 = vadd.f32 %v1085, %v1137
      %v1139 = vpop.f32.mrf.mxu0
      %v1140 = vadd.f32 %v1087, %v1139
      %1141 = vmatmul.bf16.gmra.mxu0 %v713
      %v1142 = vpop.f32.mrf.mxu0
      %v1143 = vadd.f32 %v1090, %v1142
      %v1144 = vpop.f32.mrf.mxu0
      %1145 = vdwg.mxu0
      %p1146 = scmp.eq.s32.totalorder %s14, 0
      // Predicated region
      $region33: #{fused_mul_conv_bn.1} parent=31 // pred_check
        %p1147 = pneg %p1146
      $region34: #{fused_mul_conv_bn.1} parent=31 // pred_check_branch
        %1149 = sbr.rel (%p1147) target = $region36
      $region35: #{fused_mul_conv_bn.1} parent=31 // pred_region
        %1150 = vst [vmem:[%s3] sm:$0xff] %v891
        %1151 = vst [vmem:[%s3 + $0x8] sm:$0xff] %v1103
        %1152 = vst [vmem:[%s3 + $0x10] sm:$0xff] %v893
        %1153 = vst [vmem:[%s3 + $0x18] sm:$0xff] %v1105
        %1154 = vst [vmem:[%s3 + $0x20] sm:$0xff] %v896
        %1155 = vst [vmem:[%s3 + $0x28] sm:$0xff] %v1108
        %1156 = vst [vmem:[%s3 + $0x30] sm:$0xff] %v898
        %1157 = vst [vmem:[%s3 + $0x38] sm:$0xff] %v1110
        %1158 = vst [vmem:[%s3 + $0x40] sm:$0xff] %v901
        %1159 = vst [vmem:[%s3 + $0x48] sm:$0xff] %v1113
        %1160 = vst [vmem:[%s3 + $0x50] sm:$0xff] %v903
        %1161 = vst [vmem:[%s3 + $0x58] sm:$0xff] %v1115
        %1162 = vst [vmem:[%s3 + $0x60] sm:$0xff] %v906
        %1163 = vst [vmem:[%s3 + $0x68] sm:$0xff] %v1118
        %1164 = vst [vmem:[%s3 + $0x70] sm:$0xff] %v908
        %1165 = vst [vmem:[%s3 + $0x78] sm:$0xff] %v1120
        %1166 = vst [vmem:[%s3 + $0x80] sm:$0xff] %v911
        %1167 = vst [vmem:[%s3 + $0x88] sm:$0xff] %v1123
        %1168 = vst [vmem:[%s3 + $0x90] sm:$0xff] %v913
        %1169 = vst [vmem:[%s3 + $0x98] sm:$0xff] %v1125
        %1170 = vst [vmem:[%s3 + $0xa0] sm:$0xff] %v916
        %1171 = vst [vmem:[%s3 + $0xa8] sm:$0xff] %v1128
        %1172 = vst [vmem:[%s3 + $0xb0] sm:$0xff] %v918
        %1173 = vst [vmem:[%s3 + $0xb8] sm:$0xff] %v1130
        %1174 = vst [vmem:[%s3 + $0xc0] sm:$0xff] %v921
        %1175 = vst [vmem:[%s3 + $0xc8] sm:$0xff] %v1133
        %1176 = vst [vmem:[%s3 + $0xd0] sm:$0xff] %v923
        %1177 = vst [vmem:[%s3 + $0xd8] sm:$0xff] %v1135
        %1178 = vst [vmem:[%s3 + $0xe0] sm:$0xff] %v926
        %1179 = vst [vmem:[%s3 + $0xe8] sm:$0xff] %v1138
        %1180 = vst [vmem:[%s3 + $0xf0] sm:$0xff] %v928
        %1181 = vst [vmem:[%s3 + $0xf8] sm:$0xff] %v1140
        %1182 = vst [vmem:[%s3 + $0x100] sm:$0xff] %v931
        %1183 = vst [vmem:[%s3 + $0x108] sm:$0xff] %v1143
      $region36: #{fused_mul_conv_bn.1} parent=31 // pred_fallthru
        _
      %p1184 = scmp.gt.s32.totalorder %s14, 0
      // Predicated region
      $region37: #{fused_mul_conv_bn.1} parent=31 // pred_check
        %p1185 = pneg %p1184
      $region38: #{fused_mul_conv_bn.1} parent=31 // pred_check_branch
        %1187 = sbr.rel (%p1185) target = $region40
      $region39: #{fused_mul_conv_bn.1} parent=31 // pred_region
        %v1188 = vld [vmem:[%s3] sm:$0xff]
        %v1189 = vld [vmem:[%s3 + $0x8] sm:$0xff]
        %v1190 = vld [vmem:[%s3 + $0x10] sm:$0xff]
        %v1191 = vld [vmem:[%s3 + $0x18] sm:$0xff]
        %v1192 = vld [vmem:[%s3 + $0x20] sm:$0xff]
        %v1193 = vld [vmem:[%s3 + $0x28] sm:$0xff]
        %v1194 = vld [vmem:[%s3 + $0x30] sm:$0xff]
        %v1195 = vld [vmem:[%s3 + $0x38] sm:$0xff]
        %v1196 = vld [vmem:[%s3 + $0x40] sm:$0xff]
        %v1197 = vld [vmem:[%s3 + $0x48] sm:$0xff]
        %v1198 = vld [vmem:[%s3 + $0x50] sm:$0xff]
        %v1199 = vld [vmem:[%s3 + $0x58] sm:$0xff]
        %v1200 = vld [vmem:[%s3 + $0x60] sm:$0xff]
        %v1201 = vld [vmem:[%s3 + $0x68] sm:$0xff]
        %v1202 = vld [vmem:[%s3 + $0x70] sm:$0xff]
        %v1203 = vld [vmem:[%s3 + $0x78] sm:$0xff]
        %v1204 = vld [vmem:[%s3 + $0x80] sm:$0xff]
        %v1205 = vld [vmem:[%s3 + $0x88] sm:$0xff]
        %v1206 = vld [vmem:[%s3 + $0x90] sm:$0xff]
        %v1207 = vld [vmem:[%s3 + $0x98] sm:$0xff]
        %v1208 = vld [vmem:[%s3 + $0xa0] sm:$0xff]
        %v1209 = vld [vmem:[%s3 + $0xa8] sm:$0xff]
        %v1210 = vld [vmem:[%s3 + $0xb0] sm:$0xff]
        %v1211 = vld [vmem:[%s3 + $0xb8] sm:$0xff]
        %v1212 = vld [vmem:[%s3 + $0xc0] sm:$0xff]
        %v1213 = vld [vmem:[%s3 + $0xc8] sm:$0xff]
        %v1214 = vld [vmem:[%s3 + $0xd0] sm:$0xff]
        %v1215 = vld [vmem:[%s3 + $0xd8] sm:$0xff]
        %v1216 = vld [vmem:[%s3 + $0xe0] sm:$0xff]
        %v1217 = vld [vmem:[%s3 + $0xe8] sm:$0xff]
        %v1218 = vld [vmem:[%s3 + $0xf0] sm:$0xff]
        %v1219 = vld [vmem:[%s3 + $0xf8] sm:$0xff]
        %v1220 = vld [vmem:[%s3 + $0x100] sm:$0xff]
        %v1221 = vld [vmem:[%s3 + $0x108] sm:$0xff]
        %v1222 = vadd.f32 %v1188, %v891
        %v1223 = vadd.f32 %v1189, %v1103
        %v1224 = vadd.f32 %v1190, %v893
        %v1225 = vadd.f32 %v1191, %v1105
        %v1226 = vadd.f32 %v1192, %v896
        %v1227 = vadd.f32 %v1193, %v1108
        %v1228 = vadd.f32 %v1194, %v898
        %v1229 = vadd.f32 %v1195, %v1110
        %v1230 = vadd.f32 %v1196, %v901
        %v1231 = vadd.f32 %v1197, %v1113
        %v1232 = vadd.f32 %v1198, %v903
        %v1233 = vadd.f32 %v1199, %v1115
        %v1234 = vadd.f32 %v1200, %v906
        %v1235 = vadd.f32 %v1201, %v1118
        %v1236 = vadd.f32 %v1202, %v908
        %v1237 = vadd.f32 %v1203, %v1120
        %v1238 = vadd.f32 %v1204, %v911
        %v1239 = vadd.f32 %v1205, %v1123
        %v1240 = vadd.f32 %v1206, %v913
        %v1241 = vadd.f32 %v1207, %v1125
        %v1242 = vadd.f32 %v1208, %v916
        %v1243 = vadd.f32 %v1209, %v1128
        %v1244 = vadd.f32 %v1210, %v918
        %v1245 = vadd.f32 %v1211, %v1130
        %v1246 = vadd.f32 %v1212, %v921
        %v1247 = vadd.f32 %v1213, %v1133
        %v1248 = vadd.f32 %v1214, %v923
        %v1249 = vadd.f32 %v1215, %v1135
        %v1250 = vadd.f32 %v1216, %v926
        %v1251 = vadd.f32 %v1217, %v1138
        %v1252 = vadd.f32 %v1218, %v928
        %v1253 = vadd.f32 %v1219, %v1140
        %v1254 = vadd.f32 %v1220, %v931
        %v1255 = vadd.f32 %v1221, %v1143
        %1256 = vst [vmem:[%s3] sm:$0xff] %v1222
        %1257 = vst [vmem:[%s3 + $0x8] sm:$0xff] %v1223
        %1258 = vst [vmem:[%s3 + $0x10] sm:$0xff] %v1224
        %1259 = vst [vmem:[%s3 + $0x18] sm:$0xff] %v1225
        %1260 = vst [vmem:[%s3 + $0x20] sm:$0xff] %v1226
        %1261 = vst [vmem:[%s3 + $0x28] sm:$0xff] %v1227
        %1262 = vst [vmem:[%s3 + $0x30] sm:$0xff] %v1228
        %1263 = vst [vmem:[%s3 + $0x38] sm:$0xff] %v1229
        %1264 = vst [vmem:[%s3 + $0x40] sm:$0xff] %v1230
        %1265 = vst [vmem:[%s3 + $0x48] sm:$0xff] %v1231
        %1266 = vst [vmem:[%s3 + $0x50] sm:$0xff] %v1232
        %1267 = vst [vmem:[%s3 + $0x58] sm:$0xff] %v1233
        %1268 = vst [vmem:[%s3 + $0x60] sm:$0xff] %v1234
        %1269 = vst [vmem:[%s3 + $0x68] sm:$0xff] %v1235
        %1270 = vst [vmem:[%s3 + $0x70] sm:$0xff] %v1236
        %1271 = vst [vmem:[%s3 + $0x78] sm:$0xff] %v1237
        %1272 = vst [vmem:[%s3 + $0x80] sm:$0xff] %v1238
        %1273 = vst [vmem:[%s3 + $0x88] sm:$0xff] %v1239
        %1274 = vst [vmem:[%s3 + $0x90] sm:$0xff] %v1240
        %1275 = vst [vmem:[%s3 + $0x98] sm:$0xff] %v1241
        %1276 = vst [vmem:[%s3 + $0xa0] sm:$0xff] %v1242
        %1277 = vst [vmem:[%s3 + $0xa8] sm:$0xff] %v1243
        %1278 = vst [vmem:[%s3 + $0xb0] sm:$0xff] %v1244
        %1279 = vst [vmem:[%s3 + $0xb8] sm:$0xff] %v1245
        %1280 = vst [vmem:[%s3 + $0xc0] sm:$0xff] %v1246
        %1281 = vst [vmem:[%s3 + $0xc8] sm:$0xff] %v1247
        %1282 = vst [vmem:[%s3 + $0xd0] sm:$0xff] %v1248
        %1283 = vst [vmem:[%s3 + $0xd8] sm:$0xff] %v1249
        %1284 = vst [vmem:[%s3 + $0xe0] sm:$0xff] %v1250
        %1285 = vst [vmem:[%s3 + $0xe8] sm:$0xff] %v1251
        %1286 = vst [vmem:[%s3 + $0xf0] sm:$0xff] %v1252
        %1287 = vst [vmem:[%s3 + $0xf8] sm:$0xff] %v1253
        %1288 = vst [vmem:[%s3 + $0x100] sm:$0xff] %v1254
        %1289 = vst [vmem:[%s3 + $0x108] sm:$0xff] %v1255
      $region40: #{fused_mul_conv_bn.1} parent=31 // pred_fallthru
        _
      %p1290 = scmp.eq.s32.totalorder %s14, 1
      // Predicated region
      $region41: #{fused_mul_conv_bn.1} parent=31 // pred_check
        %p1291 = pneg %p1290
      $region42: #{fused_mul_conv_bn.1} parent=31 // pred_check_branch
        %1293 = sbr.rel (%p1291) target = $region44
      $region43: #{fused_mul_conv_bn.1} parent=31 // pred_region
        %v1294 = vld [vmem:[%s3] sm:$0xff]
        %v1295 = vld [vmem:[%s3 + $0x8] sm:$0xff]
        %v1296 = vld [vmem:[%s3 + $0x10] sm:$0xff]
        %v1297 = vld [vmem:[%s3 + $0x18] sm:$0xff]
        %v1298 = vld [vmem:[%s3 + $0x20] sm:$0xff]
        %v1299 = vld [vmem:[%s3 + $0x28] sm:$0xff]
        %v1300 = vld [vmem:[%s3 + $0x30] sm:$0xff]
        %v1301 = vld [vmem:[%s3 + $0x38] sm:$0xff]
        %v1302 = vld [vmem:[%s3 + $0x40] sm:$0xff]
        %v1303 = vld [vmem:[%s3 + $0x48] sm:$0xff]
        %v1304 = vld [vmem:[%s3 + $0x50] sm:$0xff]
        %v1305 = vld [vmem:[%s3 + $0x58] sm:$0xff]
        %v1306 = vld [vmem:[%s3 + $0x60] sm:$0xff]
        %v1307 = vld [vmem:[%s3 + $0x68] sm:$0xff]
        %v1308 = vld [vmem:[%s3 + $0x70] sm:$0xff]
        %v1309 = vld [vmem:[%s3 + $0x78] sm:$0xff]
        %v1310 = vld [vmem:[%s3 + $0x80] sm:$0xff]
        %v1311 = vld [vmem:[%s3 + $0x88] sm:$0xff]
        %v1312 = vld [vmem:[%s3 + $0x90] sm:$0xff]
        %v1313 = vld [vmem:[%s3 + $0x98] sm:$0xff]
        %v1314 = vld [vmem:[%s3 + $0xa0] sm:$0xff]
        %v1315 = vld [vmem:[%s3 + $0xa8] sm:$0xff]
        %v1316 = vld [vmem:[%s3 + $0xb0] sm:$0xff]
        %v1317 = vld [vmem:[%s3 + $0xb8] sm:$0xff]
        %v1318 = vld [vmem:[%s3 + $0xc0] sm:$0xff]
        %v1319 = vld [vmem:[%s3 + $0xc8] sm:$0xff]
        %v1320 = vld [vmem:[%s3 + $0xd0] sm:$0xff]
        %v1321 = vld [vmem:[%s3 + $0xd8] sm:$0xff]
        %v1322 = vld [vmem:[%s3 + $0xe0] sm:$0xff]
        %v1323 = vld [vmem:[%s3 + $0xe8] sm:$0xff]
        %v1324 = vld [vmem:[%s3 + $0xf0] sm:$0xff]
        %v1325 = vld [vmem:[%s3 + $0xf8] sm:$0xff]
        %v1326 = vld [vmem:[%s3 + $0x100] sm:$0xff]
        %v1327 = vld [vmem:[%s3 + $0x108] sm:$0xff]
        %v1328 = vadd.f32 %v1294, %v1295
        %1329 = vadd.xlane.f32.xlu0 %v1328
        %v1330 = vpop.xlane.xlu0 %1329
        %v1331 = vadd.f32 %v1296, %v1297
        %1332 = vadd.xlane.f32.xlu0 %v1331
        %v1333 = vpop.xlane.xlu0 %1332
        %v1334 = vadd.f32 %v1298, %v1299
        %1335 = vadd.xlane.f32.xlu0 %v1334
        %v1336 = vpop.xlane.xlu0 %1335
        %v1337 = vadd.f32 %v1300, %v1301
        %1338 = vadd.xlane.f32.xlu0 %v1337
        %v1339 = vpop.xlane.xlu0 %1338
        %v1340 = vadd.f32 %v1302, %v1303
        %1341 = vadd.xlane.f32.xlu0 %v1340
        %v1342 = vpop.xlane.xlu0 %1341
        %v1343 = vadd.f32 %v1304, %v1305
        %1344 = vadd.xlane.f32.xlu0 %v1343
        %v1345 = vpop.xlane.xlu0 %1344
        %v1346 = vadd.f32 %v1306, %v1307
        %1347 = vadd.xlane.f32.xlu0 %v1346
        %v1348 = vpop.xlane.xlu0 %1347
        %v1349 = vadd.f32 %v1308, %v1309
        %1350 = vadd.xlane.f32.xlu0 %v1349
        %v1351 = vpop.xlane.xlu0 %1350
        %v1352 = vadd.f32 %v1310, %v1311
        %1353 = vadd.xlane.f32.xlu0 %v1352
        %v1354 = vpop.xlane.xlu0 %1353
        %v1355 = vadd.f32 %v1312, %v1313
        %1356 = vadd.xlane.f32.xlu0 %v1355
        %v1357 = vpop.xlane.xlu0 %1356
        %v1358 = vadd.f32 %v1314, %v1315
        %1359 = vadd.xlane.f32.xlu0 %v1358
        %v1360 = vpop.xlane.xlu0 %1359
        %v1361 = vadd.f32 %v1316, %v1317
        %1362 = vadd.xlane.f32.xlu0 %v1361
        %v1363 = vpop.xlane.xlu0 %1362
        %v1364 = vadd.f32 %v1318, %v1319
        %1365 = vadd.xlane.f32.xlu0 %v1364
        %v1366 = vpop.xlane.xlu0 %1365
        %v1367 = vadd.f32 %v1320, %v1321
        %1368 = vadd.xlane.f32.xlu0 %v1367
        %v1369 = vpop.xlane.xlu0 %1368
        %v1370 = vadd.f32 %v1322, %v1323
        %1371 = vadd.xlane.f32.xlu0 %v1370
        %v1372 = vpop.xlane.xlu0 %1371
        %v1373 = vadd.f32 %v1324, %v1325
        %1374 = vadd.xlane.f32.xlu0 %v1373
        %v1375 = vpop.xlane.xlu0 %1374
        %v1376 = vadd.f32 %v1326, %v1327
        %1377 = vadd.xlane.f32.xlu0 %v1376
        %v1378 = vpop.xlane.xlu0 %1377
        %v1379 = vmul.f32 %v1294, %v1294
        %v1380 = vmul.f32 %v1295, %v1295
        %v1381 = vmul.f32 %v1296, %v1296
        %v1382 = vmul.f32 %v1297, %v1297
        %v1383 = vmul.f32 %v1298, %v1298
        %v1384 = vmul.f32 %v1299, %v1299
        %v1385 = vmul.f32 %v1300, %v1300
        %v1386 = vmul.f32 %v1301, %v1301
        %v1387 = vmul.f32 %v1302, %v1302
        %v1388 = vmul.f32 %v1303, %v1303
        %v1389 = vmul.f32 %v1304, %v1304
        %v1390 = vmul.f32 %v1305, %v1305
        %v1391 = vmul.f32 %v1306, %v1306
        %v1392 = vmul.f32 %v1307, %v1307
        %v1393 = vmul.f32 %v1308, %v1308
        %v1394 = vmul.f32 %v1309, %v1309
        %v1395 = vmul.f32 %v1310, %v1310
        %v1396 = vmul.f32 %v1311, %v1311
        %v1397 = vmul.f32 %v1312, %v1312
        %v1398 = vmul.f32 %v1313, %v1313
        %v1399 = vmul.f32 %v1314, %v1314
        %v1400 = vmul.f32 %v1315, %v1315
        %v1401 = vmul.f32 %v1316, %v1316
        %v1402 = vmul.f32 %v1317, %v1317
        %v1403 = vmul.f32 %v1318, %v1318
        %v1404 = vmul.f32 %v1319, %v1319
        %v1405 = vmul.f32 %v1320, %v1320
        %v1406 = vmul.f32 %v1321, %v1321
        %v1407 = vmul.f32 %v1322, %v1322
        %v1408 = vmul.f32 %v1323, %v1323
        %v1409 = vmul.f32 %v1324, %v1324
        %v1410 = vmul.f32 %v1325, %v1325
        %v1411 = vmul.f32 %v1326, %v1326
        %v1412 = vmul.f32 %v1327, %v1327
        %v1413 = vadd.f32 %v1379, %v1380
        %1414 = vadd.xlane.f32.xlu0 %v1413
        %v1415 = vpop.xlane.xlu0 %1414
        %v1416 = vadd.f32 %v1381, %v1382
        %1417 = vadd.xlane.f32.xlu0 %v1416
        %v1418 = vpop.xlane.xlu0 %1417
        %v1419 = vadd.f32 %v1383, %v1384
        %1420 = vadd.xlane.f32.xlu0 %v1419
        %v1421 = vpop.xlane.xlu0 %1420
        %v1422 = vadd.f32 %v1385, %v1386
        %1423 = vadd.xlane.f32.xlu0 %v1422
        %v1424 = vpop.xlane.xlu0 %1423
        %v1425 = vadd.f32 %v1387, %v1388
        %1426 = vadd.xlane.f32.xlu0 %v1425
        %v1427 = vpop.xlane.xlu0 %1426
        %v1428 = vadd.f32 %v1389, %v1390
        %1429 = vadd.xlane.f32.xlu0 %v1428
        %v1430 = vpop.xlane.xlu0 %1429
        %v1431 = vadd.f32 %v1391, %v1392
        %1432 = vadd.xlane.f32.xlu0 %v1431
        %v1433 = vpop.xlane.xlu0 %1432
        %v1434 = vadd.f32 %v1393, %v1394
        %1435 = vadd.xlane.f32.xlu0 %v1434
        %v1436 = vpop.xlane.xlu0 %1435
        %v1437 = vadd.f32 %v1395, %v1396
        %1438 = vadd.xlane.f32.xlu0 %v1437
        %v1439 = vpop.xlane.xlu0 %1438
        %v1440 = vadd.f32 %v1397, %v1398
        %1441 = vadd.xlane.f32.xlu0 %v1440
        %v1442 = vpop.xlane.xlu0 %1441
        %v1443 = vadd.f32 %v1399, %v1400
        %1444 = vadd.xlane.f32.xlu0 %v1443
        %v1445 = vpop.xlane.xlu0 %1444
        %v1446 = vadd.f32 %v1401, %v1402
        %1447 = vadd.xlane.f32.xlu0 %v1446
        %v1448 = vpop.xlane.xlu0 %1447
        %v1449 = vadd.f32 %v1403, %v1404
        %1450 = vadd.xlane.f32.xlu0 %v1449
        %v1451 = vpop.xlane.xlu0 %1450
        %v1452 = vadd.f32 %v1405, %v1406
        %1453 = vadd.xlane.f32.xlu0 %v1452
        %v1454 = vpop.xlane.xlu0 %1453
        %v1455 = vadd.f32 %v1407, %v1408
        %1456 = vadd.xlane.f32.xlu0 %v1455
        %v1457 = vpop.xlane.xlu0 %1456
        %v1458 = vadd.f32 %v1409, %v1410
        %1459 = vadd.xlane.f32.xlu0 %v1458
        %v1460 = vpop.xlane.xlu0 %1459
        %v1461 = vadd.f32 %v1411, %v1412
        %1462 = vadd.xlane.f32.xlu0 %v1461
        %v1463 = vpop.xlane.xlu0 %1462
        %v1464 = vmul.f32 %v1330, 0.0051020407
        %v1465 = vmul.f32 %v1333, 0.0051020407
        %v1466 = vmul.f32 %v1336, 0.0051020407
        %v1467 = vmul.f32 %v1339, 0.0051020407
        %v1468 = vmul.f32 %v1342, 0.0051020407
        %v1469 = vmul.f32 %v1345, 0.0051020407
        %v1470 = vmul.f32 %v1348, 0.0051020407
        %v1471 = vmul.f32 %v1351, 0.0051020407
        %v1472 = vmul.f32 %v1354, 0.0051020407
        %v1473 = vmul.f32 %v1357, 0.0051020407
        %v1474 = vmul.f32 %v1360, 0.0051020407
        %v1475 = vmul.f32 %v1363, 0.0051020407
        %v1476 = vmul.f32 %v1366, 0.0051020407
        %v1477 = vmul.f32 %v1369, 0.0051020407
        %v1478 = vmul.f32 %v1372, 0.0051020407
        %v1479 = vmul.f32 %v1375, 0.0051020407
        %v1480 = vmul.f32 %v1378, 0.0051020407
        %v1481 = vmul.f32 %v1415, 0.0051020407
        %v1482 = vmul.f32 %v1418, 0.0051020407
        %v1483 = vmul.f32 %v1421, 0.0051020407
        %v1484 = vmul.f32 %v1424, 0.0051020407
        %v1485 = vmul.f32 %v1427, 0.0051020407
        %v1486 = vmul.f32 %v1430, 0.0051020407
        %v1487 = vmul.f32 %v1433, 0.0051020407
        %v1488 = vmul.f32 %v1436, 0.0051020407
        %v1489 = vmul.f32 %v1439, 0.0051020407
        %v1490 = vmul.f32 %v1442, 0.0051020407
        %v1491 = vmul.f32 %v1445, 0.0051020407
        %v1492 = vmul.f32 %v1448, 0.0051020407
        %v1493 = vmul.f32 %v1451, 0.0051020407
        %v1494 = vmul.f32 %v1454, 0.0051020407
        %v1495 = vmul.f32 %v1457, 0.0051020407
        %v1496 = vmul.f32 %v1460, 0.0051020407
        %v1497 = vmul.f32 %v1463, 0.0051020407
        %v1498 = vmul.f32 %v1464, %v1464
        %v1499 = vmul.f32 %v1465, %v1465
        %v1500 = vmul.f32 %v1466, %v1466
        %v1501 = vmul.f32 %v1467, %v1467
        %v1502 = vmul.f32 %v1468, %v1468
        %v1503 = vmul.f32 %v1469, %v1469
        %v1504 = vmul.f32 %v1470, %v1470
        %v1505 = vmul.f32 %v1471, %v1471
        %v1506 = vmul.f32 %v1472, %v1472
        %v1507 = vmul.f32 %v1473, %v1473
        %v1508 = vmul.f32 %v1474, %v1474
        %v1509 = vmul.f32 %v1475, %v1475
        %v1510 = vmul.f32 %v1476, %v1476
        %v1511 = vmul.f32 %v1477, %v1477
        %v1512 = vmul.f32 %v1478, %v1478
        %v1513 = vmul.f32 %v1479, %v1479
        %v1514 = vmul.f32 %v1480, %v1480
        %v1515 = vsub.f32 %v1481, %v1498
        %v1516 = vsub.f32 %v1482, %v1499
        %v1517 = vsub.f32 %v1483, %v1500
        %v1518 = vsub.f32 %v1484, %v1501
        %v1519 = vsub.f32 %v1485, %v1502
        %v1520 = vsub.f32 %v1486, %v1503
        %v1521 = vsub.f32 %v1487, %v1504
        %v1522 = vsub.f32 %v1488, %v1505
        %v1523 = vsub.f32 %v1489, %v1506
        %v1524 = vsub.f32 %v1490, %v1507
        %v1525 = vsub.f32 %v1491, %v1508
        %v1526 = vsub.f32 %v1492, %v1509
        %v1527 = vsub.f32 %v1493, %v1510
        %v1528 = vsub.f32 %v1494, %v1511
        %v1529 = vsub.f32 %v1495, %v1512
        %v1530 = vsub.f32 %v1496, %v1513
        %v1531 = vsub.f32 %v1497, %v1514
        %v1532 = vmax.f32 %v1515, 0.0
        %v1533 = vmax.f32 %v1516, 0.0
        %v1534 = vmax.f32 %v1517, 0.0
        %v1535 = vmax.f32 %v1518, 0.0
        %v1536 = vmax.f32 %v1519, 0.0
        %v1537 = vmax.f32 %v1520, 0.0
        %v1538 = vmax.f32 %v1521, 0.0
        %v1539 = vmax.f32 %v1522, 0.0
        %v1540 = vmax.f32 %v1523, 0.0
        %v1541 = vmax.f32 %v1524, 0.0
        %v1542 = vmax.f32 %v1525, 0.0
        %v1543 = vmax.f32 %v1526, 0.0
        %v1544 = vmax.f32 %v1527, 0.0
        %v1545 = vmax.f32 %v1528, 0.0
        %v1546 = vmax.f32 %v1529, 0.0
        %v1547 = vmax.f32 %v1530, 0.0
        %v1548 = vmax.f32 %v1531, 0.0
        %v1549 = vadd.f32 %v1532, 1e-05
        %v1550 = vadd.f32 %v1533, 1e-05
        %v1551 = vadd.f32 %v1534, 1e-05
        %v1552 = vadd.f32 %v1535, 1e-05
        %v1553 = vadd.f32 %v1536, 1e-05
        %v1554 = vadd.f32 %v1537, 1e-05
        %v1555 = vadd.f32 %v1538, 1e-05
        %v1556 = vadd.f32 %v1539, 1e-05
        %v1557 = vadd.f32 %v1540, 1e-05
        %v1558 = vadd.f32 %v1541, 1e-05
        %v1559 = vadd.f32 %v1542, 1e-05
        %v1560 = vadd.f32 %v1543, 1e-05
        %v1561 = vadd.f32 %v1544, 1e-05
        %v1562 = vadd.f32 %v1545, 1e-05
        %v1563 = vadd.f32 %v1546, 1e-05
        %v1564 = vadd.f32 %v1547, 1e-05
        %v1565 = vadd.f32 %v1548, 1e-05
        %v1566 = vrsqrt.pop %v1549
        %v1567 = vmul.f32 %v1566, %v1549
        %v1568 = vmul.f32 %v1567, %v1566
        %v1569 = vmul.f32 0.5, %v1568
        %v1570 = vsub.f32 1.5, %v1569
        %v1571 = vmul.f32 %v1566, %v1570
        %vm1572 = vweird.f32 %v1549
        %vm1573 = vweird.f32 %v1566
        %vm1574 = vmor %vm1572, %vm1573
        %v1575 = vsel %vm1574, %v1566, %v1571
        %v1576 = vrsqrt.pop %v1550
        %v1577 = vmul.f32 %v1576, %v1550
        %v1578 = vmul.f32 %v1577, %v1576
        %v1579 = vmul.f32 0.5, %v1578
        %v1580 = vsub.f32 1.5, %v1579
        %v1581 = vmul.f32 %v1576, %v1580
        %vm1582 = vweird.f32 %v1550
        %vm1583 = vweird.f32 %v1576
        %vm1584 = vmor %vm1582, %vm1583
        %v1585 = vsel %vm1584, %v1576, %v1581
        %v1586 = vrsqrt.pop %v1551
        %v1587 = vmul.f32 %v1586, %v1551
        %v1588 = vmul.f32 %v1587, %v1586
        %v1589 = vmul.f32 0.5, %v1588
        %v1590 = vsub.f32 1.5, %v1589
        %v1591 = vmul.f32 %v1586, %v1590
        %vm1592 = vweird.f32 %v1551
        %vm1593 = vweird.f32 %v1586
        %vm1594 = vmor %vm1592, %vm1593
        %v1595 = vsel %vm1594, %v1586, %v1591
        %v1596 = vrsqrt.pop %v1552
        %v1597 = vmul.f32 %v1596, %v1552
        %v1598 = vmul.f32 %v1597, %v1596
        %v1599 = vmul.f32 0.5, %v1598
        %v1600 = vsub.f32 1.5, %v1599
        %v1601 = vmul.f32 %v1596, %v1600
        %vm1602 = vweird.f32 %v1552
        %vm1603 = vweird.f32 %v1596
        %vm1604 = vmor %vm1602, %vm1603
        %v1605 = vsel %vm1604, %v1596, %v1601
        %v1606 = vrsqrt.pop %v1553
        %v1607 = vmul.f32 %v1606, %v1553
        %v1608 = vmul.f32 %v1607, %v1606
        %v1609 = vmul.f32 0.5, %v1608
        %v1610 = vsub.f32 1.5, %v1609
        %v1611 = vmul.f32 %v1606, %v1610
        %vm1612 = vweird.f32 %v1553
        %vm1613 = vweird.f32 %v1606
        %vm1614 = vmor %vm1612, %vm1613
        %v1615 = vsel %vm1614, %v1606, %v1611
        %v1616 = vrsqrt.pop %v1554
        %v1617 = vmul.f32 %v1616, %v1554
        %v1618 = vmul.f32 %v1617, %v1616
        %v1619 = vmul.f32 0.5, %v1618
        %v1620 = vsub.f32 1.5, %v1619
        %v1621 = vmul.f32 %v1616, %v1620
        %vm1622 = vweird.f32 %v1554
        %vm1623 = vweird.f32 %v1616
        %vm1624 = vmor %vm1622, %vm1623
        %v1625 = vsel %vm1624, %v1616, %v1621
        %v1626 = vrsqrt.pop %v1555
        %v1627 = vmul.f32 %v1626, %v1555
        %v1628 = vmul.f32 %v1627, %v1626
        %v1629 = vmul.f32 0.5, %v1628
        %v1630 = vsub.f32 1.5, %v1629
        %v1631 = vmul.f32 %v1626, %v1630
        %vm1632 = vweird.f32 %v1555
        %vm1633 = vweird.f32 %v1626
        %vm1634 = vmor %vm1632, %vm1633
        %v1635 = vsel %vm1634, %v1626, %v1631
        %v1636 = vrsqrt.pop %v1556
        %v1637 = vmul.f32 %v1636, %v1556
        %v1638 = vmul.f32 %v1637, %v1636
        %v1639 = vmul.f32 0.5, %v1638
        %v1640 = vsub.f32 1.5, %v1639
        %v1641 = vmul.f32 %v1636, %v1640
        %vm1642 = vweird.f32 %v1556
        %vm1643 = vweird.f32 %v1636
        %vm1644 = vmor %vm1642, %vm1643
        %v1645 = vsel %vm1644, %v1636, %v1641
        %v1646 = vrsqrt.pop %v1557
        %v1647 = vmul.f32 %v1646, %v1557
        %v1648 = vmul.f32 %v1647, %v1646
        %v1649 = vmul.f32 0.5, %v1648
        %v1650 = vsub.f32 1.5, %v1649
        %v1651 = vmul.f32 %v1646, %v1650
        %vm1652 = vweird.f32 %v1557
        %vm1653 = vweird.f32 %v1646
        %vm1654 = vmor %vm1652, %vm1653
        %v1655 = vsel %vm1654, %v1646, %v1651
        %v1656 = vrsqrt.pop %v1558
        %v1657 = vmul.f32 %v1656, %v1558
        %v1658 = vmul.f32 %v1657, %v1656
        %v1659 = vmul.f32 0.5, %v1658
        %v1660 = vsub.f32 1.5, %v1659
        %v1661 = vmul.f32 %v1656, %v1660
        %vm1662 = vweird.f32 %v1558
        %vm1663 = vweird.f32 %v1656
        %vm1664 = vmor %vm1662, %vm1663
        %v1665 = vsel %vm1664, %v1656, %v1661
        %v1666 = vrsqrt.pop %v1559
        %v1667 = vmul.f32 %v1666, %v1559
        %v1668 = vmul.f32 %v1667, %v1666
        %v1669 = vmul.f32 0.5, %v1668
        %v1670 = vsub.f32 1.5, %v1669
        %v1671 = vmul.f32 %v1666, %v1670
        %vm1672 = vweird.f32 %v1559
        %vm1673 = vweird.f32 %v1666
        %vm1674 = vmor %vm1672, %vm1673
        %v1675 = vsel %vm1674, %v1666, %v1671
        %v1676 = vrsqrt.pop %v1560
        %v1677 = vmul.f32 %v1676, %v1560
        %v1678 = vmul.f32 %v1677, %v1676
        %v1679 = vmul.f32 0.5, %v1678
        %v1680 = vsub.f32 1.5, %v1679
        %v1681 = vmul.f32 %v1676, %v1680
        %vm1682 = vweird.f32 %v1560
        %vm1683 = vweird.f32 %v1676
        %vm1684 = vmor %vm1682, %vm1683
        %v1685 = vsel %vm1684, %v1676, %v1681
        %v1686 = vrsqrt.pop %v1561
        %v1687 = vmul.f32 %v1686, %v1561
        %v1688 = vmul.f32 %v1687, %v1686
        %v1689 = vmul.f32 0.5, %v1688
        %v1690 = vsub.f32 1.5, %v1689
        %v1691 = vmul.f32 %v1686, %v1690
        %vm1692 = vweird.f32 %v1561
        %vm1693 = vweird.f32 %v1686
        %vm1694 = vmor %vm1692, %vm1693
        %v1695 = vsel %vm1694, %v1686, %v1691
        %v1696 = vrsqrt.pop %v1562
        %v1697 = vmul.f32 %v1696, %v1562
        %v1698 = vmul.f32 %v1697, %v1696
        %v1699 = vmul.f32 0.5, %v1698
        %v1700 = vsub.f32 1.5, %v1699
        %v1701 = vmul.f32 %v1696, %v1700
        %vm1702 = vweird.f32 %v1562
        %vm1703 = vweird.f32 %v1696
        %vm1704 = vmor %vm1702, %vm1703
        %v1705 = vsel %vm1704, %v1696, %v1701
        %v1706 = vrsqrt.pop %v1563
        %v1707 = vmul.f32 %v1706, %v1563
        %v1708 = vmul.f32 %v1707, %v1706
        %v1709 = vmul.f32 0.5, %v1708
        %v1710 = vsub.f32 1.5, %v1709
        %v1711 = vmul.f32 %v1706, %v1710
        %vm1712 = vweird.f32 %v1563
        %vm1713 = vweird.f32 %v1706
        %vm1714 = vmor %vm1712, %vm1713
        %v1715 = vsel %vm1714, %v1706, %v1711
        %v1716 = vrsqrt.pop %v1564
        %v1717 = vmul.f32 %v1716, %v1564
        %v1718 = vmul.f32 %v1717, %v1716
        %v1719 = vmul.f32 0.5, %v1718
        %v1720 = vsub.f32 1.5, %v1719
        %v1721 = vmul.f32 %v1716, %v1720
        %vm1722 = vweird.f32 %v1564
        %vm1723 = vweird.f32 %v1716
        %vm1724 = vmor %vm1722, %vm1723
        %v1725 = vsel %vm1724, %v1716, %v1721
        %v1726 = vrsqrt.pop %v1565
        %v1727 = vmul.f32 %v1726, %v1565
        %v1728 = vmul.f32 %v1727, %v1726
        %v1729 = vmul.f32 0.5, %v1728
        %v1730 = vsub.f32 1.5, %v1729
        %v1731 = vmul.f32 %v1726, %v1730
        %vm1732 = vweird.f32 %v1565
        %vm1733 = vweird.f32 %v1726
        %vm1734 = vmor %vm1732, %vm1733
        %v1735 = vsel %vm1734, %v1726, %v1731
        %v1736 = vld [vmem:[%s2] sm:$0xff]
        %v1737 = vld [vmem:[%s2 + $0x8] sm:$0xff]
        %v1738 = vld [vmem:[%s2 + $0x10] sm:$0xff]
        %v1739 = vld [vmem:[%s2 + $0x18] sm:$0xff]
        %v1740 = vld [vmem:[%s2 + $0x20] sm:$0xff]
        %v1741 = vld [vmem:[%s2 + $0x28] sm:$0xff]
        %v1742 = vld [vmem:[%s2 + $0x30] sm:$0xff]
        %v1743 = vld [vmem:[%s2 + $0x38] sm:$0xff]
        %v1744 = vld [vmem:[%s2 + $0x40] sm:$0xff]
        %v1745 = vld [vmem:[%s2 + $0x48] sm:$0xff]
        %v1746 = vld [vmem:[%s2 + $0x50] sm:$0xff]
        %v1747 = vld [vmem:[%s2 + $0x58] sm:$0xff]
        %v1748 = vld [vmem:[%s2 + $0x60] sm:$0xff]
        %v1749 = vld [vmem:[%s2 + $0x68] sm:$0xff]
        %v1750 = vld [vmem:[%s2 + $0x70] sm:$0xff]
        %v1751 = vld [vmem:[%s2 + $0x78] sm:$0xff]
        %v1752 = vld [vmem:[%s2 + $0x80] sm:$0xff]
        %v1753 = vmul.f32 %v1575, %v1736
        %v1754 = vmul.f32 %v1585, %v1737
        %v1755 = vmul.f32 %v1595, %v1738
        %v1756 = vmul.f32 %v1605, %v1739
        %v1757 = vmul.f32 %v1615, %v1740
        %v1758 = vmul.f32 %v1625, %v1741
        %v1759 = vmul.f32 %v1635, %v1742
        %v1760 = vmul.f32 %v1645, %v1743
        %v1761 = vmul.f32 %v1655, %v1744
        %v1762 = vmul.f32 %v1665, %v1745
        %v1763 = vmul.f32 %v1675, %v1746
        %v1764 = vmul.f32 %v1685, %v1747
        %v1765 = vmul.f32 %v1695, %v1748
        %v1766 = vmul.f32 %v1705, %v1749
        %v1767 = vmul.f32 %v1715, %v1750
        %v1768 = vmul.f32 %v1725, %v1751
        %v1769 = vmul.f32 %v1735, %v1752
        %v1770 = vmul.f32 %v1464, %v1753
        %v1771 = vmul.f32 %v1465, %v1754
        %v1772 = vmul.f32 %v1466, %v1755
        %v1773 = vmul.f32 %v1467, %v1756
        %v1774 = vmul.f32 %v1468, %v1757
        %v1775 = vmul.f32 %v1469, %v1758
        %v1776 = vmul.f32 %v1470, %v1759
        %v1777 = vmul.f32 %v1471, %v1760
        %v1778 = vmul.f32 %v1472, %v1761
        %v1779 = vmul.f32 %v1473, %v1762
        %v1780 = vmul.f32 %v1474, %v1763
        %v1781 = vmul.f32 %v1475, %v1764
        %v1782 = vmul.f32 %v1476, %v1765
        %v1783 = vmul.f32 %v1477, %v1766
        %v1784 = vmul.f32 %v1478, %v1767
        %v1785 = vmul.f32 %v1479, %v1768
        %v1786 = vmul.f32 %v1480, %v1769
        %1804 = vrot.lane.b32.xlu0 %v1770, 1
        %v1805 = vpop.permute.xlu0 %1804
        %1806 = vrot.lane.b32.xlu0 %v1771, 1
        %v1807 = vpop.permute.xlu0 %1806
        %1808 = vrot.lane.b32.xlu0 %v1772, 1
        %v1809 = vpop.permute.xlu0 %1808
        %1810 = vrot.lane.b32.xlu0 %v1773, 1
        %v1811 = vpop.permute.xlu0 %1810
        %1812 = vrot.lane.b32.xlu0 %v1774, 1
        %v1813 = vpop.permute.xlu0 %1812
        %1814 = vrot.lane.b32.xlu0 %v1775, 1
        %v1815 = vpop.permute.xlu0 %1814
        %1816 = vrot.lane.b32.xlu0 %v1776, 1
        %v1817 = vpop.permute.xlu0 %1816
        %1818 = vrot.lane.b32.xlu0 %v1777, 1
        %v1819 = vpop.permute.xlu0 %1818
        %1820 = vrot.lane.b32.xlu0 %v1778, 1
        %v1821 = vpop.permute.xlu0 %1820
        %1822 = vrot.lane.b32.xlu0 %v1779, 1
        %v1823 = vpop.permute.xlu0 %1822
        %1824 = vrot.lane.b32.xlu0 %v1780, 1
        %v1825 = vpop.permute.xlu0 %1824
        %1826 = vrot.lane.b32.xlu0 %v1781, 1
        %v1827 = vpop.permute.xlu0 %1826
        %1828 = vrot.lane.b32.xlu0 %v1782, 1
        %v1829 = vpop.permute.xlu0 %1828
        %1830 = vrot.lane.b32.xlu0 %v1783, 1
        %v1831 = vpop.permute.xlu0 %1830
        %1832 = vrot.lane.b32.xlu0 %v1784, 1
        %v1833 = vpop.permute.xlu0 %1832
        %1834 = vrot.lane.b32.xlu0 %v1785, 1
        %v1835 = vpop.permute.xlu0 %1834
        %1836 = vrot.lane.b32.xlu0 %v1786, 1
        %v1837 = vpop.permute.xlu0 %1836
        %v1855 = vsub.f32 %v1736, %v1805
        %v1856 = vsub.f32 %v1737, %v1807
        %v1857 = vsub.f32 %v1738, %v1809
        %v1858 = vsub.f32 %v1739, %v1811
        %v1859 = vsub.f32 %v1740, %v1813
        %v1860 = vsub.f32 %v1741, %v1815
        %v1861 = vsub.f32 %v1742, %v1817
        %v1862 = vsub.f32 %v1743, %v1819
        %v1863 = vsub.f32 %v1744, %v1821
        %v1864 = vsub.f32 %v1745, %v1823
        %v1865 = vsub.f32 %v1746, %v1825
        %v1866 = vsub.f32 %v1747, %v1827
        %v1867 = vsub.f32 %v1748, %v1829
        %v1868 = vsub.f32 %v1749, %v1831
        %v1869 = vsub.f32 %v1750, %v1833
        %v1870 = vsub.f32 %v1751, %v1835
        %v1871 = vsub.f32 %v1752, %v1837
        %1873 = vset.pattern.permute.xlu0 0
        %1874 = vperm.xlu0 %1873, %v1753
        %v1875 = vpop.permute.xlu0 %1874
        %1878 = vset.pattern.permute.xlu0 0
        %1879 = vperm.xlu0 %1878, %v1754
        %v1880 = vpop.permute.xlu0 %1879
        %1883 = vset.pattern.permute.xlu0 0
        %1884 = vperm.xlu0 %1883, %v1755
        %v1885 = vpop.permute.xlu0 %1884
        %1888 = vset.pattern.permute.xlu0 0
        %1889 = vperm.xlu0 %1888, %v1756
        %v1890 = vpop.permute.xlu0 %1889
        %1893 = vset.pattern.permute.xlu0 0
        %1894 = vperm.xlu0 %1893, %v1757
        %v1895 = vpop.permute.xlu0 %1894
        %1898 = vset.pattern.permute.xlu0 0
        %1899 = vperm.xlu0 %1898, %v1758
        %v1900 = vpop.permute.xlu0 %1899
        %1903 = vset.pattern.permute.xlu0 0
        %1904 = vperm.xlu0 %1903, %v1759
        %v1905 = vpop.permute.xlu0 %1904
        %1908 = vset.pattern.permute.xlu0 0
        %1909 = vperm.xlu0 %1908, %v1760
        %v1910 = vpop.permute.xlu0 %1909
        %1913 = vset.pattern.permute.xlu0 0
        %1914 = vperm.xlu0 %1913, %v1761
        %v1915 = vpop.permute.xlu0 %1914
        %1918 = vset.pattern.permute.xlu0 0
        %1919 = vperm.xlu0 %1918, %v1762
        %v1920 = vpop.permute.xlu0 %1919
        %1923 = vset.pattern.permute.xlu0 0
        %1924 = vperm.xlu0 %1923, %v1763
        %v1925 = vpop.permute.xlu0 %1924
        %1928 = vset.pattern.permute.xlu0 0
        %1929 = vperm.xlu0 %1928, %v1764
        %v1930 = vpop.permute.xlu0 %1929
        %1933 = vset.pattern.permute.xlu0 0
        %1934 = vperm.xlu0 %1933, %v1765
        %v1935 = vpop.permute.xlu0 %1934
        %1938 = vset.pattern.permute.xlu0 0
        %1939 = vperm.xlu0 %1938, %v1766
        %v1940 = vpop.permute.xlu0 %1939
        %1943 = vset.pattern.permute.xlu0 0
        %1944 = vperm.xlu0 %1943, %v1767
        %v1945 = vpop.permute.xlu0 %1944
        %1948 = vset.pattern.permute.xlu0 0
        %1949 = vperm.xlu0 %1948, %v1768
        %v1950 = vpop.permute.xlu0 %1949
        %1953 = vset.pattern.permute.xlu0 0
        %1954 = vperm.xlu0 %1953, %v1769
        %v1955 = vpop.permute.xlu0 %1954
        %v1957 = vmul.f32 %v1294, %v1875
        %v1958 = vmul.f32 %v1295, %v1875
        %v1959 = vmul.f32 %v1296, %v1880
        %v1960 = vmul.f32 %v1297, %v1880
        %v1961 = vmul.f32 %v1298, %v1885
        %v1962 = vmul.f32 %v1299, %v1885
        %v1963 = vmul.f32 %v1300, %v1890
        %v1964 = vmul.f32 %v1301, %v1890
        %v1965 = vmul.f32 %v1302, %v1895
        %v1966 = vmul.f32 %v1303, %v1895
        %v1967 = vmul.f32 %v1304, %v1900
        %v1968 = vmul.f32 %v1305, %v1900
        %v1969 = vmul.f32 %v1306, %v1905
        %v1970 = vmul.f32 %v1307, %v1905
        %v1971 = vmul.f32 %v1308, %v1910
        %v1972 = vmul.f32 %v1309, %v1910
        %v1973 = vmul.f32 %v1310, %v1915
        %v1974 = vmul.f32 %v1311, %v1915
        %v1975 = vmul.f32 %v1312, %v1920
        %v1976 = vmul.f32 %v1313, %v1920
        %v1977 = vmul.f32 %v1314, %v1925
        %v1978 = vmul.f32 %v1315, %v1925
        %v1979 = vmul.f32 %v1316, %v1930
        %v1980 = vmul.f32 %v1317, %v1930
        %v1981 = vmul.f32 %v1318, %v1935
        %v1982 = vmul.f32 %v1319, %v1935
        %v1983 = vmul.f32 %v1320, %v1940
        %v1984 = vmul.f32 %v1321, %v1940
        %v1985 = vmul.f32 %v1322, %v1945
        %v1986 = vmul.f32 %v1323, %v1945
        %v1987 = vmul.f32 %v1324, %v1950
        %v1988 = vmul.f32 %v1325, %v1950
        %v1989 = vmul.f32 %v1326, %v1955
        %v1990 = vmul.f32 %v1327, %v1955
        %1992 = vset.pattern.permute.xlu0 1
        %1993 = vperm.xlu0 %1992, %v1855
        %v1994 = vpop.permute.xlu0 %1993
        %1997 = vset.pattern.permute.xlu0 1
        %1998 = vperm.xlu0 %1997, %v1856
        %v1999 = vpop.permute.xlu0 %1998
        %2002 = vset.pattern.permute.xlu0 1
        %2003 = vperm.xlu0 %2002, %v1857
        %v2004 = vpop.permute.xlu0 %2003
        %2007 = vset.pattern.permute.xlu0 1
        %2008 = vperm.xlu0 %2007, %v1858
        %v2009 = vpop.permute.xlu0 %2008
        %2012 = vset.pattern.permute.xlu0 1
        %2013 = vperm.xlu0 %2012, %v1859
        %v2014 = vpop.permute.xlu0 %2013
        %2017 = vset.pattern.permute.xlu0 1
        %2018 = vperm.xlu0 %2017, %v1860
        %v2019 = vpop.permute.xlu0 %2018
        %2022 = vset.pattern.permute.xlu0 1
        %2023 = vperm.xlu0 %2022, %v1861
        %v2024 = vpop.permute.xlu0 %2023
        %2027 = vset.pattern.permute.xlu0 1
        %2028 = vperm.xlu0 %2027, %v1862
        %v2029 = vpop.permute.xlu0 %2028
        %2032 = vset.pattern.permute.xlu0 1
        %2033 = vperm.xlu0 %2032, %v1863
        %v2034 = vpop.permute.xlu0 %2033
        %2037 = vset.pattern.permute.xlu0 1
        %2038 = vperm.xlu0 %2037, %v1864
        %v2039 = vpop.permute.xlu0 %2038
        %2042 = vset.pattern.permute.xlu0 1
        %2043 = vperm.xlu0 %2042, %v1865
        %v2044 = vpop.permute.xlu0 %2043
        %2047 = vset.pattern.permute.xlu0 1
        %2048 = vperm.xlu0 %2047, %v1866
        %v2049 = vpop.permute.xlu0 %2048
        %2052 = vset.pattern.permute.xlu0 1
        %2053 = vperm.xlu0 %2052, %v1867
        %v2054 = vpop.permute.xlu0 %2053
        %2057 = vset.pattern.permute.xlu0 1
        %2058 = vperm.xlu0 %2057, %v1868
        %v2059 = vpop.permute.xlu0 %2058
        %2062 = vset.pattern.permute.xlu0 1
        %2063 = vperm.xlu0 %2062, %v1869
        %v2064 = vpop.permute.xlu0 %2063
        %2067 = vset.pattern.permute.xlu0 1
        %2068 = vperm.xlu0 %2067, %v1870
        %v2069 = vpop.permute.xlu0 %2068
        %2072 = vset.pattern.permute.xlu0 1
        %2073 = vperm.xlu0 %2072, %v1871
        %v2074 = vpop.permute.xlu0 %2073
        %v2076 = vadd.f32 %v1957, %v1994
        %v2077 = vadd.f32 %v1958, %v1994
        %v2078 = vadd.f32 %v1959, %v1999
        %v2079 = vadd.f32 %v1960, %v1999
        %v2080 = vadd.f32 %v1961, %v2004
        %v2081 = vadd.f32 %v1962, %v2004
        %v2082 = vadd.f32 %v1963, %v2009
        %v2083 = vadd.f32 %v1964, %v2009
        %v2084 = vadd.f32 %v1965, %v2014
        %v2085 = vadd.f32 %v1966, %v2014
        %v2086 = vadd.f32 %v1967, %v2019
        %v2087 = vadd.f32 %v1968, %v2019
        %v2088 = vadd.f32 %v1969, %v2024
        %v2089 = vadd.f32 %v1970, %v2024
        %v2090 = vadd.f32 %v1971, %v2029
        %v2091 = vadd.f32 %v1972, %v2029
        %v2092 = vadd.f32 %v1973, %v2034
        %v2093 = vadd.f32 %v1974, %v2034
        %v2094 = vadd.f32 %v1975, %v2039
        %v2095 = vadd.f32 %v1976, %v2039
        %v2096 = vadd.f32 %v1977, %v2044
        %v2097 = vadd.f32 %v1978, %v2044
        %v2098 = vadd.f32 %v1979, %v2049
        %v2099 = vadd.f32 %v1980, %v2049
        %v2100 = vadd.f32 %v1981, %v2054
        %v2101 = vadd.f32 %v1982, %v2054
        %v2102 = vadd.f32 %v1983, %v2059
        %v2103 = vadd.f32 %v1984, %v2059
        %v2104 = vadd.f32 %v1985, %v2064
        %v2105 = vadd.f32 %v1986, %v2064
        %v2106 = vadd.f32 %v1987, %v2069
        %v2107 = vadd.f32 %v1988, %v2069
        %v2108 = vadd.f32 %v1989, %v2074
        %v2109 = vadd.f32 %v1990, %v2074
        %2110 = vst [vmem:[%s3] sm:$0xff] %v2076
        %2111 = vst [vmem:[%s3 + $0x8] sm:$0xff] %v2077
        %2112 = vst [vmem:[%s3 + $0x10] sm:$0xff] %v2078
        %2113 = vst [vmem:[%s3 + $0x18] sm:$0xff] %v2079
        %2114 = vst [vmem:[%s3 + $0x20] sm:$0xff] %v2080
        %2115 = vst [vmem:[%s3 + $0x28] sm:$0xff] %v2081
        %2116 = vst [vmem:[%s3 + $0x30] sm:$0xff] %v2082
        %2117 = vst [vmem:[%s3 + $0x38] sm:$0xff] %v2083
        %2118 = vst [vmem:[%s3 + $0x40] sm:$0xff] %v2084
        %2119 = vst [vmem:[%s3 + $0x48] sm:$0xff] %v2085
        %2120 = vst [vmem:[%s3 + $0x50] sm:$0xff] %v2086
        %2121 = vst [vmem:[%s3 + $0x58] sm:$0xff] %v2087
        %2122 = vst [vmem:[%s3 + $0x60] sm:$0xff] %v2088
        %2123 = vst [vmem:[%s3 + $0x68] sm:$0xff] %v2089
        %2124 = vst [vmem:[%s3 + $0x70] sm:$0xff] %v2090
        %2125 = vst [vmem:[%s3 + $0x78] sm:$0xff] %v2091
        %2126 = vst [vmem:[%s3 + $0x80] sm:$0xff] %v2092
        %2127 = vst [vmem:[%s3 + $0x88] sm:$0xff] %v2093
        %2128 = vst [vmem:[%s3 + $0x90] sm:$0xff] %v2094
        %2129 = vst [vmem:[%s3 + $0x98] sm:$0xff] %v2095
        %2130 = vst [vmem:[%s3 + $0xa0] sm:$0xff] %v2096
        %2131 = vst [vmem:[%s3 + $0xa8] sm:$0xff] %v2097
        %2132 = vst [vmem:[%s3 + $0xb0] sm:$0xff] %v2098
        %2133 = vst [vmem:[%s3 + $0xb8] sm:$0xff] %v2099
        %2134 = vst [vmem:[%s3 + $0xc0] sm:$0xff] %v2100
        %2135 = vst [vmem:[%s3 + $0xc8] sm:$0xff] %v2101
        %2136 = vst [vmem:[%s3 + $0xd0] sm:$0xff] %v2102
        %2137 = vst [vmem:[%s3 + $0xd8] sm:$0xff] %v2103
        %2138 = vst [vmem:[%s3 + $0xe0] sm:$0xff] %v2104
        %2139 = vst [vmem:[%s3 + $0xe8] sm:$0xff] %v2105
        %2140 = vst [vmem:[%s3 + $0xf0] sm:$0xff] %v2106
        %2141 = vst [vmem:[%s3 + $0xf8] sm:$0xff] %v2107
        %2142 = vst [vmem:[%s3 + $0x100] sm:$0xff] %v2108
        %2143 = vst [vmem:[%s3 + $0x108] sm:$0xff] %v2109
      $region44: #{fused_mul_conv_bn.1} parent=31 // pred_fallthru
        _
      // Predicated region
      $region45: #{fused_mul_conv_bn.1} parent=31 // pred_check
        %p2144 = pneg %p100
      $region46: #{fused_mul_conv_bn.1} parent=31 // pred_check_branch
        %2146 = sbr.rel (%p2144) target = $region48
      $region47: #{fused_mul_conv_bn.1} parent=31 // pred_region
        _
      $region48: #{fused_mul_conv_bn.1} parent=31 // pred_fallthru
        _
      // Predicated region
      $region49: #{fused_mul_conv_bn.1} parent=31 // pred_check
        %p2147 = pneg %p100
      $region50: #{fused_mul_conv_bn.1} parent=31 // pred_check_branch
        %2149 = sbr.rel (%p2147) target = $region52
      $region51: #{fused_mul_conv_bn.1} parent=31 // pred_region
        _
      $region52: #{fused_mul_conv_bn.1} parent=31 // pred_fallthru
        _
    $region32: #{fused_mul_conv_bn.1} parent=5 // pred_fallthru
      _
    %p2150 = scmp.le.s32.totalorder 2, %s9
    // Predicated region
    $region53: #{fused_mul_conv_bn.1} parent=5 // pred_check
      %p2151 = pneg %p2150
    $region54: #{fused_mul_conv_bn.1} parent=5 // pred_check_branch
      %2153 = sbr.rel (%p2151) target = $region56
    $region55: #{fused_mul_conv_bn.1} parent=5 // pred_region
      %s2154 = ssub.s32 %s9, 2
    $region56: #{fused_mul_conv_bn.1} parent=5 // pred_fallthru
      _
  $region6: #{fused_mul_conv_bn.1} parent=0 // loop_footer
    %s13 = sadd.s32 1, %s9
  $region7: #{fused_mul_conv_bn.1} parent=0 // loop_footer_branch
    %8 = sbr.rel target = $region3
  $region8: #{fused_mul_conv_bn.1} parent=0 // loop_exit
    _

</llo_original>
